<compile_context>
chip_gen: v7x
topology: tpu7x:2x2x1
jax: 0.10.0
libtpu: 0.0.40
codegen_flags: <defaults>
</compile_context>

<pallas_src>
import functools

import jax
import jax.numpy as jnp
from jax.experimental import pallas as pl
from jax.experimental.pallas import tpu as pltpu


def _round_up(a, m):
    return (a + m - 1) // m * m


def basic_conv2d_kernel(x_ref, w_ref, scale_ref, shift_ref, out_ref, patches_ref, *,
                        nb, c_in, shifts, l_out, apply_relu):
    # x_ref      : (nb, C_in, Lin)      zero-padded, flattened input images
    # w_ref      : (C_out, C_in*K*K)    conv weights, column order (tap, ci)
    # scale_ref  : (C_out, 1)           folded BN scale  = gamma / sqrt(var + eps)
    # shift_ref  : (C_out, 1)           folded BN shift  = beta  - mean * scale
    # out_ref    : (nb, C_out, L_OUT)   lane-dense conv + bn + relu output
    # patches_ref: (C_in*K*K, L_OUT)    VMEM scratch ("im2row" matrix)
    w = w_ref[...]
    scale = scale_ref[...]
    shift = shift_ref[...]
    for b in range(nb):                                   # static unroll over images
        # Build the im2row matrix: each conv tap (ky, kx) is a flat shift of
        # s = (ky*d)*Wp + kx*d in the flattened padded image.
        for t, s in enumerate(shifts):
            patches_ref[t * c_in:(t + 1) * c_in, :] = x_ref[b, :, s:s + l_out]
        # Whole KxK conv as a single MXU matmul: (C_out, C_in*K*K) @ (C_in*K*K, L_OUT)
        acc = jnp.dot(w, patches_ref[...],
                      preferred_element_type=jnp.float32,
                      precision=jax.lax.Precision.HIGHEST)  # (C_out, L_OUT)
        y = acc * scale + shift                             # fused inference BatchNorm
        if apply_relu:
            y = jnp.maximum(y, 0.0)
        out_ref[b] = y.astype(out_ref.dtype)


def basic_conv2d_forward(x, weight, gamma, beta, running_mean, running_var, *,
                         stride=1, padding=0, dilation=1, relu=False,
                         eps=1e-5, nb=None):
    # TODO(synk): stride > 1 has no clean mapping onto the flat-shift matmul
    # formulation (needs strided lane gathers); only stride == 1 is implemented.
    assert stride == 1, "only stride=1 supported"
    N, C_in, H, W = x.shape
    C_out, c_in_w, K, K2 = weight.shape
    assert c_in_w == C_in and K == K2

    Hp, Wp = H + 2 * padding, W + 2 * padding
    H_out = Hp - dilation * (K - 1)
    W_out = Wp - dilation * (K - 1)
    assert H_out > 0 and W_out > 0

    if nb is None:
        nb = 1          # keep >= 2 parallel grid steps so both v7x TensorCores work
    assert N % nb == 0

    # Flat-shift trick: tap (ky, kx) == shift of ky*d*Wp + kx*d in the flattened
    # padded image; the wrapped-around columns are garbage and are sliced off below.
    shifts = tuple(ky * dilation * Wp + kx * dilation
                   for ky in range(K) for kx in range(K))
    l_out = _round_up(H_out * Wp, 128)                # lane-dense output width
    l_in = _round_up(max(shifts) + l_out, 128)        # lane-dense input width

    # Layout plumbing in the wrapper (cheap XLA ops); compute stays in the kernel.
    x_pad = jnp.pad(x.astype(jnp.float32),
                    ((0, 0), (0, 0), (padding, padding), (padding, padding)))
    x_flat = x_pad.reshape(N, C_in, Hp * Wp)
    x_flat = jnp.pad(x_flat, ((0, 0), (0, 0), (0, l_in - Hp * Wp)))

    # weight (C_out, C_in, K, K) -> (C_out, K*K*C_in), column order (tap, ci).
    w_mat = jnp.transpose(weight, (0, 2, 3, 1)).reshape(C_out, K * K * C_in)
    w_mat = w_mat.astype(jnp.float32)

    # Fold inference-mode BatchNorm into a per-channel scale/shift.
    # TODO(synk): training-mode BatchNorm (batch statistics) is not implemented.
    inv = (gamma / jnp.sqrt(running_var + eps)).astype(jnp.float32)
    scale = inv.reshape(C_out, 1)
    shift = (beta - running_mean * inv).astype(jnp.float32).reshape(C_out, 1)

    kern = functools.partial(basic_conv2d_kernel, nb=nb, c_in=C_in,
                             shifts=shifts, l_out=l_out, apply_relu=relu)

    out_flat = pl.pallas_call(
        kern,
        out_shape=jax.ShapeDtypeStruct((N, C_out, l_out), jnp.float32),
        grid_spec=pltpu.PrefetchScalarGridSpec(
            num_scalar_prefetch=0,
            grid=(N // nb,),
            in_specs=[
                pl.BlockSpec((nb, C_in, l_in), lambda i: (i, 0, 0)),          # images
                pl.BlockSpec((C_out, K * K * C_in), lambda i: (0, 0)),        # weights
                pl.BlockSpec((C_out, 1), lambda i: (0, 0)),                   # BN scale
                pl.BlockSpec((C_out, 1), lambda i: (0, 0)),                   # BN shift
            ],
            out_specs=pl.BlockSpec((nb, C_out, l_out), lambda i: (i, 0, 0)),
            scratch_shapes=[pltpu.VMEM((K * K * C_in, l_out), jnp.float32)],
        ),
        compiler_params=pltpu.CompilerParams(
            dimension_semantics=("parallel",),
            vmem_limit_bytes=32 * 1024 * 1024,
        ),
    )(x_flat, w_mat, scale, shift)

    # Drop the wrap-around garbage columns and return to NCHW.
    out = out_flat[:, :, :H_out * Wp].reshape(N, C_out, H_out, Wp)
    return out[:, :, :, :W_out]


def basic_conv2d_reference(x, weight, gamma, beta, running_mean, running_var, *,
                           stride=1, padding=0, dilation=1, relu=False, eps=1e-5):
    """Pure-JAX reference matching the PyTorch forward (inference-mode BN)."""
    y = jax.lax.conv_general_dilated(
        x, weight,
        window_strides=(stride, stride),
        padding=[(padding, padding), (padding, padding)],
        rhs_dilation=(dilation, dilation),
        dimension_numbers=("NCHW", "OIHW", "NCHW"),
        precision=jax.lax.Precision.HIGHEST)
    inv = gamma / jnp.sqrt(running_var + eps)
    y = y * inv[None, :, None, None] + (beta - running_mean * inv)[None, :, None, None]
    if relu:
        y = jnp.maximum(y, 0.0)
    return y


if __name__ == "__main__":
    N, C_in, C_out, H, W, K = 2, 4, 8, 16, 16, 3
    padding, relu = 1, True

    key = jax.random.PRNGKey(0)
    kx, kw, kg, kb, km, kv = jax.random.split(key, 6)
    x = jax.random.normal(kx, (N, C_in, H, W), dtype=jnp.float32)
    weight = 0.2 * jax.random.normal(kw, (C_out, C_in, K, K), dtype=jnp.float32)
    gamma = 0.5 + jax.random.uniform(kg, (C_out,), dtype=jnp.float32)
    beta = 0.1 * jax.random.normal(kb, (C_out,), dtype=jnp.float32)
    running_mean = 0.1 * jax.random.normal(km, (C_out,), dtype=jnp.float32)
    running_var = 0.5 + jax.random.uniform(kv, (C_out,), dtype=jnp.float32)

    out = basic_conv2d_forward(x, weight, gamma, beta, running_mean, running_var,
                               padding=padding, relu=relu)
    out = jax.block_until_ready(out)

    ref = basic_conv2d_reference(x, weight, gamma, beta, running_mean, running_var,
                                 padding=padding, relu=relu)
    assert out.shape == ref.shape == (N, C_out, H, W), out.shape
    max_err = float(jnp.max(jnp.abs(out - ref)))
    assert jnp.allclose(out, ref, atol=1e-4, rtol=1e-4), f"max abs err = {max_err}"

    print("KERNEL_OK")
</pallas_src>

<mosaic_0001>
module attributes {stable_mosaic.version = 11 : i64} {
  func.func @basic_conv2d_kernel(%arg0: i32, %arg1: memref<1x4x512xf32, #tpu.memory_space<vmem>>, %arg2: memref<8x36xf32, #tpu.memory_space<vmem>>, %arg3: memref<8x1xf32, #tpu.memory_space<vmem>>, %arg4: memref<8x1xf32, #tpu.memory_space<vmem>>, %arg5: memref<1x8x384xf32, #tpu.memory_space<vmem>>, %arg6: memref<36x384xf32, #tpu.memory_space<vmem>>) attributes {dimension_semantics = [#tpu.dimension_semantics<parallel>], iteration_bounds = array<i64: 2>, scalar_prefetch = 0 : i64, scratch_operands = 1 : i64, tpu.core_type = #tpu.core_type<tc>, window_params = [{transform_indices = @transform_0, window_bounds = array<i64: 1, 4, 512>}, {pipeline_mode = #tpu.pipeline_mode<synchronous>, transform_indices = @transform_1, window_bounds = array<i64: 8, 36>}, {pipeline_mode = #tpu.pipeline_mode<synchronous>, transform_indices = @transform_2, window_bounds = array<i64: 8, 1>}, {pipeline_mode = #tpu.pipeline_mode<synchronous>, transform_indices = @transform_3, window_bounds = array<i64: 8, 1>}, {transform_indices = @transform_4, window_bounds = array<i64: 1, 8, 384>}]} {
    %c0 = arith.constant 0 : index
    %c0_0 = arith.constant 0 : index
    %0 = vector.load %arg2[%c0, %c0_0] : memref<8x36xf32, #tpu.memory_space<vmem>>, vector<8x36xf32>
    %c0_1 = arith.constant 0 : index
    %c0_2 = arith.constant 0 : index
    %1 = vector.load %arg3[%c0_1, %c0_2] : memref<8x1xf32, #tpu.memory_space<vmem>>, vector<8x1xf32>
    %c0_3 = arith.constant 0 : index
    %c0_4 = arith.constant 0 : index
    %2 = vector.load %arg4[%c0_3, %c0_4] : memref<8x1xf32, #tpu.memory_space<vmem>>, vector<8x1xf32>
    %c0_5 = arith.constant 0 : index
    %c0_6 = arith.constant 0 : index
    %c0_7 = arith.constant 0 : index
    %3 = vector.load %arg1[%c0_5, %c0_6, %c0_7] : memref<1x4x512xf32, #tpu.memory_space<vmem>>, vector<1x4x384xf32>
    %4 = vector.shape_cast %3 : vector<1x4x384xf32> to vector<4x384xf32>
    %c0_8 = arith.constant 0 : index
    %c0_9 = arith.constant 0 : index
    %5 = vector.load %arg6[%c0_8, %c0_9] : memref<36x384xf32, #tpu.memory_space<vmem>>, vector<4x384xf32>
    tpu.vector_store %arg6[%c0_8, %c0_9], %4 {strides = array<i32>} : memref<36x384xf32, #tpu.memory_space<vmem>>, vector<4x384xf32>,
    %c0_10 = arith.constant 0 : index
    %c0_11 = arith.constant 0 : index
    %c1 = arith.constant 1 : index
    %6 = vector.load %arg1[%c0_10, %c0_11, %c1] : memref<1x4x512xf32, #tpu.memory_space<vmem>>, vector<1x4x384xf32>
    %7 = vector.shape_cast %6 : vector<1x4x384xf32> to vector<4x384xf32>
    %c4 = arith.constant 4 : index
    %c0_12 = arith.constant 0 : index
    %8 = vector.load %arg6[%c4, %c0_12] : memref<36x384xf32, #tpu.memory_space<vmem>>, vector<4x384xf32>
    tpu.vector_store %arg6[%c4, %c0_12], %7 {strides = array<i32>} : memref<36x384xf32, #tpu.memory_space<vmem>>, vector<4x384xf32>,
    %c0_13 = arith.constant 0 : index
    %c0_14 = arith.constant 0 : index
    %c2 = arith.constant 2 : index
    %9 = vector.load %arg1[%c0_13, %c0_14, %c2] : memref<1x4x512xf32, #tpu.memory_space<vmem>>, vector<1x4x384xf32>
    %10 = vector.shape_cast %9 : vector<1x4x384xf32> to vector<4x384xf32>
    %c8 = arith.constant 8 : index
    %c0_15 = arith.constant 0 : index
    %11 = vector.load %arg6[%c8, %c0_15] : memref<36x384xf32, #tpu.memory_space<vmem>>, vector<4x384xf32>
    tpu.vector_store %arg6[%c8, %c0_15], %10 {strides = array<i32>} : memref<36x384xf32, #tpu.memory_space<vmem>>, vector<4x384xf32>,
    %c0_16 = arith.constant 0 : index
    %c0_17 = arith.constant 0 : index
    %c18 = arith.constant 18 : index
    %12 = vector.load %arg1[%c0_16, %c0_17, %c18] : memref<1x4x512xf32, #tpu.memory_space<vmem>>, vector<1x4x384xf32>
    %13 = vector.shape_cast %12 : vector<1x4x384xf32> to vector<4x384xf32>
    %c12 = arith.constant 12 : index
    %c0_18 = arith.constant 0 : index
    %14 = vector.load %arg6[%c12, %c0_18] : memref<36x384xf32, #tpu.memory_space<vmem>>, vector<4x384xf32>
    tpu.vector_store %arg6[%c12, %c0_18], %13 {strides = array<i32>} : memref<36x384xf32, #tpu.memory_space<vmem>>, vector<4x384xf32>,
    %c0_19 = arith.constant 0 : index
    %c0_20 = arith.constant 0 : index
    %c19 = arith.constant 19 : index
    %15 = vector.load %arg1[%c0_19, %c0_20, %c19] : memref<1x4x512xf32, #tpu.memory_space<vmem>>, vector<1x4x384xf32>
    %16 = vector.shape_cast %15 : vector<1x4x384xf32> to vector<4x384xf32>
    %c16 = arith.constant 16 : index
    %c0_21 = arith.constant 0 : index
    %17 = vector.load %arg6[%c16, %c0_21] : memref<36x384xf32, #tpu.memory_space<vmem>>, vector<4x384xf32>
    tpu.vector_store %arg6[%c16, %c0_21], %16 {strides = array<i32>} : memref<36x384xf32, #tpu.memory_space<vmem>>, vector<4x384xf32>,
    %c0_22 = arith.constant 0 : index
    %c0_23 = arith.constant 0 : index
    %c20 = arith.constant 20 : index
    %18 = vector.load %arg1[%c0_22, %c0_23, %c20] : memref<1x4x512xf32, #tpu.memory_space<vmem>>, vector<1x4x384xf32>
    %19 = vector.shape_cast %18 : vector<1x4x384xf32> to vector<4x384xf32>
    %c20_24 = arith.constant 20 : index
    %c0_25 = arith.constant 0 : index
    %20 = vector.load %arg6[%c20_24, %c0_25] : memref<36x384xf32, #tpu.memory_space<vmem>>, vector<4x384xf32>
    tpu.vector_store %arg6[%c20_24, %c0_25], %19 {strides = array<i32>} : memref<36x384xf32, #tpu.memory_space<vmem>>, vector<4x384xf32>,
    %c0_26 = arith.constant 0 : index
    %c0_27 = arith.constant 0 : index
    %c36 = arith.constant 36 : index
    %21 = vector.load %arg1[%c0_26, %c0_27, %c36] : memref<1x4x512xf32, #tpu.memory_space<vmem>>, vector<1x4x384xf32>
    %22 = vector.shape_cast %21 : vector<1x4x384xf32> to vector<4x384xf32>
    %c24 = arith.constant 24 : index
    %c0_28 = arith.constant 0 : index
    %23 = vector.load %arg6[%c24, %c0_28] : memref<36x384xf32, #tpu.memory_space<vmem>>, vector<4x384xf32>
    tpu.vector_store %arg6[%c24, %c0_28], %22 {strides = array<i32>} : memref<36x384xf32, #tpu.memory_space<vmem>>, vector<4x384xf32>,
    %c0_29 = arith.constant 0 : index
    %c0_30 = arith.constant 0 : index
    %c37 = arith.constant 37 : index
    %24 = vector.load %arg1[%c0_29, %c0_30, %c37] : memref<1x4x512xf32, #tpu.memory_space<vmem>>, vector<1x4x384xf32>
    %25 = vector.shape_cast %24 : vector<1x4x384xf32> to vector<4x384xf32>
    %c28 = arith.constant 28 : index
    %c0_31 = arith.constant 0 : index
    %26 = vector.load %arg6[%c28, %c0_31] : memref<36x384xf32, #tpu.memory_space<vmem>>, vector<4x384xf32>
    tpu.vector_store %arg6[%c28, %c0_31], %25 {strides = array<i32>} : memref<36x384xf32, #tpu.memory_space<vmem>>, vector<4x384xf32>,
    %c0_32 = arith.constant 0 : index
    %c0_33 = arith.constant 0 : index
    %c38 = arith.constant 38 : index
    %27 = vector.load %arg1[%c0_32, %c0_33, %c38] : memref<1x4x512xf32, #tpu.memory_space<vmem>>, vector<1x4x384xf32>
    %28 = vector.shape_cast %27 : vector<1x4x384xf32> to vector<4x384xf32>
    %c32 = arith.constant 32 : index
    %c0_34 = arith.constant 0 : index
    %29 = vector.load %arg6[%c32, %c0_34] : memref<36x384xf32, #tpu.memory_space<vmem>>, vector<4x384xf32>
    tpu.vector_store %arg6[%c32, %c0_34], %28 {strides = array<i32>} : memref<36x384xf32, #tpu.memory_space<vmem>>, vector<4x384xf32>,
    %c0_35 = arith.constant 0 : index
    %c0_36 = arith.constant 0 : index
    %30 = vector.load %arg6[%c0_35, %c0_36] : memref<36x384xf32, #tpu.memory_space<vmem>>, vector<36x384xf32>
    %cst = arith.constant dense<0.000000e+00> : vector<8x384xf32>
    %31 = tpu.matmul %0, %30, %cst {dimension_numbers = #tpu.dot_dimension_numbers<[1], [0], [0], [1], [0, 0, 1, 1], [], []>, precision = #tpu.contract_precision<fp32>} : vector<8x36xf32>, vector<36x384xf32>, vector<8x384xf32> -> vector<8x384xf32>
    %32 = vector.broadcast %1 : vector<8x1xf32> to vector<8x384xf32>
    %33 = arith.mulf %31, %32 : vector<8x384xf32>
    %34 = vector.broadcast %2 : vector<8x1xf32> to vector<8x384xf32>
    %35 = arith.addf %33, %34 : vector<8x384xf32>
    %cst_37 = arith.constant 0.000000e+00 : f32
    %36 = vector.broadcast %cst_37 : f32 to vector<8x384xf32>
    %37 = arith.maximumf %35, %36 : vector<8x384xf32>
    %c0_38 = arith.constant 0 : index
    %c0_39 = arith.constant 0 : index
    %c0_40 = arith.constant 0 : index
    %38 = vector.load %arg5[%c0_38, %c0_39, %c0_40] : memref<1x8x384xf32, #tpu.memory_space<vmem>>, vector<1x8x384xf32>
    %39 = vector.shape_cast %38 : vector<1x8x384xf32> to vector<8x384xf32>
    %40 = vector.shape_cast %37 : vector<8x384xf32> to vector<1x8x384xf32>
    tpu.vector_store %arg5[%c0_38, %c0_39, %c0_40], %40 {strides = array<i32>} : memref<1x8x384xf32, #tpu.memory_space<vmem>>, vector<1x8x384xf32>,
    return
  }
  func.func @transform_0(%arg0: i32) -> (i32, i32, i32) {
    %c0_i32 = arith.constant 0 : i32
    %c0_i32_0 = arith.constant 0 : i32
    %c0_i32_1 = arith.constant 0 : i32
    return %arg0, %c0_i32, %c0_i32_0 : i32, i32, i32
  }
  func.func @transform_1(%arg0: i32) -> (i32, i32) {
    %c0_i32 = arith.constant 0 : i32
    %c0_i32_0 = arith.constant 0 : i32
    %c0_i32_1 = arith.constant 0 : i32
    return %c0_i32, %c0_i32_0 : i32, i32
  }
  func.func @transform_2(%arg0: i32) -> (i32, i32) {
    %c0_i32 = arith.constant 0 : i32
    %c0_i32_0 = arith.constant 0 : i32
    %c0_i32_1 = arith.constant 0 : i32
    return %c0_i32, %c0_i32_0 : i32, i32
  }
  func.func @transform_3(%arg0: i32) -> (i32, i32) {
    %c0_i32 = arith.constant 0 : i32
    %c0_i32_0 = arith.constant 0 : i32
    %c0_i32_1 = arith.constant 0 : i32
    return %c0_i32, %c0_i32_0 : i32, i32
  }
  func.func @transform_4(%arg0: i32) -> (i32, i32, i32) {
    %c0_i32 = arith.constant 0 : i32
    %c0_i32_0 = arith.constant 0 : i32
    %c0_i32_1 = arith.constant 0 : i32
    return %arg0, %c0_i32, %c0_i32_0 : i32, i32, i32
  }
}

</mosaic_0001>

<llo_original>
// kernel: tpu_custom_call.1
$region0: #{tpu_custom_call.1}
  #allocation0 [shape = 'u32[]', space=smem, size = 0x4, offset = 0x4, fixed_abs, tag = 'smem constant byte address 0x4 - core index']
  #allocation1 [shape = 'u32[144,128]{1,0:T(1,128)}', space=vmem, size = 0x12000, scoped, tag = 'internal scratch']
  #allocation2 [shape = 'f32[36,384]{1,0:T(8,128)}', space=vmem, size = 0xf000, scoped, tag = 'scratch operand']
  %s0 = inlined_call_operand.hbm [shape: f32[2,4,512], index: 0, kind: input, shape index: {}]
  %s1 = inlined_call_operand.vmem [shape: f32[8,36], index: 1, kind: input, shape index: {}]
  %s2 = inlined_call_operand.vmem [shape: f32[8,1], index: 2, kind: input, shape index: {}]
  %s3 = inlined_call_operand.vmem [shape: f32[8,1], index: 3, kind: input, shape index: {}]
  %s4 = inlined_call_operand.hbm [shape: f32[2,8,384], index: 4, kind: output, shape index: {}]
  %s5 = sld [smem:[#allocation0]]
  $region53: #{tpu_custom_call.1} parent=0
    _
  %s7 = ssub.s32 1, %s5
  %s8 = scalar_select 0, %s7, %s5
  $region1: #{tpu_custom_call.1} parent=0
    #allocation3 [shape = 'u8[16384]{0}', space=vmem, size = 0x4000, scoped, tag = 'input window, operand 0']
    #allocation4 [shape = 's32[2]{0}', space=sflag, size = 0x8, scoped, tag = 'scoped memory for tpu_custom_call.1']
    #allocation5 [shape = 's32[2]{0}', space=sflag, size = 0x8, scoped, tag = 'scoped memory for tpu_custom_call.1']
    #allocation6 [shape = 'u8[24576]{0}', space=vmem, size = 0x6000, scoped, tag = 'output window, operand 0']
    %9 = vsyncpa [#allocation4], 0
    %s10 = scalar_lea.sflag [#allocation4], 1
    %11 = vsyncpa %s10, 0
    %12 = vsyncpa [#allocation5], 0
    %s13 = scalar_lea.sflag [#allocation5], 1
    %14 = vsyncpa %s13, 0
    loop: start=0, step=1, limit=4
    $region2: #{tpu_custom_call.1} parent=1 // loop_pre_header
      _
    $region3: #{tpu_custom_call.1} parent=1 // loop_header
      %s16 = sphi 0, %s20
      %p17 = scmp.ge.s32.totalorder %s16, 4
      %s26 = sphi 0, %s28
      %s29 = sphi 0, %s26
      %s30 = sphi 0, %s29
      %s46 = sphi 0, %s30
      %s50 = sphi 0, %s50
      %s52 = sphi 0, %s50
      %s53 = sphi 0, %s52
      %s67 = sphi 0, %s53
      %s71 = sphi 0, %s71
      %s73 = sphi 0, %s71
      %s74 = sphi 0, %s73
      %s88 = sphi 0, %s74
      %s92 = sphi 0, %s92
      %s94 = sphi 0, %s92
      %s95 = sphi 0, %s94
      %s109 = sphi 0, %s95
      %s115 = sphi 0, %s117
      %s118 = sphi 0, %s115
      %s119 = sphi 0, %s118
      %s135 = sphi 0, %s119
    $region4: #{tpu_custom_call.1} parent=1 // loop_header_branch
      %19 = sbr.rel (%p17) target = $region8
    $region5: #{tpu_custom_call.1} parent=1 // loop_body
      %s21 = ssub.s32 %s16, 1
      %s22 = ssub.s32 %s16, 2
      %s23 = sadd.s32 %s16, 1
      %s24 = ssub.s32 %s16, %s23
      %p25 = scmp.eq.s32.totalorder %s24, 0
      %s27 = sadd.s32 %s26, 1
      %s28 = scalar_select %p25, %s26, %s27
      %p31 = pneg %p25
      %p32 = scmp.eq.s32.totalorder %s16, 1
      %p33 = por %p31, %p32
      %p34 = scmp.ne.s32.totalorder %s26, %s29
      %p35 = scmp.eq.s32.totalorder %s16, 0
      %p36 = por %p34, %p35
      %p37 = scmp.ne.s32.totalorder %s26, %s29
      %p38 = scmp.eq.s32.totalorder %s21, 1
      %p39 = por %p37, %p38
      %p40 = scmp.ne.s32.totalorder %s29, %s30
      %p41 = scmp.eq.s32.totalorder %s21, 0
      %p42 = por %p40, %p41
      %p43 = scmp.ne.s32.totalorder %s29, %s30
      %p44 = scmp.eq.s32.totalorder %s22, 1
      %p45 = por %p43, %p44
      %p47 = scmp.ne.s32.totalorder %s30, %s46
      %p48 = scmp.eq.s32.totalorder %s22, 0
      %p49 = por %p47, %p48
      %s51 = sadd.s32 %s50, 1
      %p54 = scmp.eq.s32.totalorder %s16, 1
      %p55 = scmp.ne.s32.totalorder %s50, %s52
      %p56 = scmp.eq.s32.totalorder %s16, 0
      %p57 = por %p55, %p56
      %p58 = scmp.ne.s32.totalorder %s50, %s52
      %p59 = scmp.eq.s32.totalorder %s21, 1
      %p60 = por %p58, %p59
      %p61 = scmp.ne.s32.totalorder %s52, %s53
      %p62 = scmp.eq.s32.totalorder %s21, 0
      %p63 = por %p61, %p62
      %p64 = scmp.ne.s32.totalorder %s52, %s53
      %p65 = scmp.eq.s32.totalorder %s22, 1
      %p66 = por %p64, %p65
      %p68 = scmp.ne.s32.totalorder %s53, %s67
      %p69 = scmp.eq.s32.totalorder %s22, 0
      %p70 = por %p68, %p69
      %s72 = sadd.s32 %s71, 1
      %p75 = scmp.eq.s32.totalorder %s16, 1
      %p76 = scmp.ne.s32.totalorder %s71, %s73
      %p77 = scmp.eq.s32.totalorder %s16, 0
      %p78 = por %p76, %p77
      %p79 = scmp.ne.s32.totalorder %s71, %s73
      %p80 = scmp.eq.s32.totalorder %s21, 1
      %p81 = por %p79, %p80
      %p82 = scmp.ne.s32.totalorder %s73, %s74
      %p83 = scmp.eq.s32.totalorder %s21, 0
      %p84 = por %p82, %p83
      %p85 = scmp.ne.s32.totalorder %s73, %s74
      %p86 = scmp.eq.s32.totalorder %s22, 1
      %p87 = por %p85, %p86
      %p89 = scmp.ne.s32.totalorder %s74, %s88
      %p90 = scmp.eq.s32.totalorder %s22, 0
      %p91 = por %p89, %p90
      %s93 = sadd.s32 %s92, 1
      %p96 = scmp.eq.s32.totalorder %s16, 1
      %p97 = scmp.ne.s32.totalorder %s92, %s94
      %p98 = scmp.eq.s32.totalorder %s16, 0
      %p99 = por %p97, %p98
      %p100 = scmp.ne.s32.totalorder %s92, %s94
      %p101 = scmp.eq.s32.totalorder %s21, 1
      %p102 = por %p100, %p101
      %p103 = scmp.ne.s32.totalorder %s94, %s95
      %p104 = scmp.eq.s32.totalorder %s21, 0
      %p105 = por %p103, %p104
      %p106 = scmp.ne.s32.totalorder %s94, %s95
      %p107 = scmp.eq.s32.totalorder %s22, 1
      %p108 = por %p106, %p107
      %p110 = scmp.ne.s32.totalorder %s95, %s109
      %p111 = scmp.eq.s32.totalorder %s22, 0
      %p112 = por %p110, %p111
      %s113 = ssub.s32 %s16, %s23
      %p114 = scmp.eq.s32.totalorder %s113, 0
      %s116 = sadd.s32 %s115, 1
      %s117 = scalar_select %p114, %s115, %s116
      %p120 = pneg %p114
      %p121 = scmp.eq.s32.totalorder %s16, 1
      %p122 = por %p120, %p121
      %p123 = scmp.ne.s32.totalorder %s115, %s118
      %p124 = scmp.eq.s32.totalorder %s16, 0
      %p125 = por %p123, %p124
      %p126 = scmp.ne.s32.totalorder %s115, %s118
      %p127 = scmp.eq.s32.totalorder %s21, 1
      %p128 = por %p126, %p127
      %p129 = scmp.ne.s32.totalorder %s118, %s119
      %p130 = scmp.eq.s32.totalorder %s21, 0
      %p131 = por %p129, %p130
      %p132 = scmp.ne.s32.totalorder %s118, %s119
      %p133 = scmp.eq.s32.totalorder %s22, 1
      %p134 = por %p132, %p133
      %p136 = scmp.ne.s32.totalorder %s119, %s135
      %p137 = scmp.eq.s32.totalorder %s22, 0
      %p138 = por %p136, %p137
      %p139 = scmp.le.s32.totalorder 1, %s16
      %p140 = scmp.lt.s32.totalorder %s16, 3
      %p141 = pnand %p139, %p140
      %p142 = pneg %p141
      // Predicated region
      $region9: #{tpu_custom_call.1} parent=5 // pred_check
        _
      $region10: #{tpu_custom_call.1} parent=5 // pred_check_branch
        %144 = sbr.rel (%p141) target = $region12
      $region11: #{tpu_custom_call.1} parent=5 // pred_region
        %s145 = ssub.s32 %s16, 1
        // Predicated region
        $region13: #{tpu_custom_call.1} parent=11 // pred_check
          %p146 = pneg %p63
        $region14: #{tpu_custom_call.1} parent=11 // pred_check_branch
          %148 = sbr.rel (%p146) target = $region16
        $region15: #{tpu_custom_call.1} parent=11 // pred_region
          _
        $region16: #{tpu_custom_call.1} parent=11 // pred_fallthru
          _
        // Predicated region
        $region17: #{tpu_custom_call.1} parent=11 // pred_check
          %p149 = pneg %p84
        $region18: #{tpu_custom_call.1} parent=11 // pred_check_branch
          %151 = sbr.rel (%p149) target = $region20
        $region19: #{tpu_custom_call.1} parent=11 // pred_region
          _
        $region20: #{tpu_custom_call.1} parent=11 // pred_fallthru
          _
        // Predicated region
        $region21: #{tpu_custom_call.1} parent=11 // pred_check
          %p152 = pneg %p105
        $region22: #{tpu_custom_call.1} parent=11 // pred_check_branch
          %154 = sbr.rel (%p152) target = $region24
        $region23: #{tpu_custom_call.1} parent=11 // pred_region
          _
        $region24: #{tpu_custom_call.1} parent=11 // pred_fallthru
          _
      $region12: #{tpu_custom_call.1} parent=5 // pred_fallthru
        _
      %p155 = scmp.lt.s32.totalorder %s16, 2
      // Predicated region
      $region25: #{tpu_custom_call.1} parent=5 // pred_check
        %p156 = pneg %p155
      $region26: #{tpu_custom_call.1} parent=5 // pred_check_branch
        %158 = sbr.rel (%p156) target = $region28
      $region27: #{tpu_custom_call.1} parent=5 // pred_region
        // Predicated region
        $region29: #{tpu_custom_call.1} parent=27 // pred_check
          %p159 = pneg %p36
        $region30: #{tpu_custom_call.1} parent=27 // pred_check_branch
          %161 = sbr.rel (%p159) target = $region32
        $region31: #{tpu_custom_call.1} parent=27 // pred_region
          %s162 = sand.u32 %s26, 1
          %s163 = scalar_lea.sflag [#allocation4], %s162
          %s164 = sand.u32 %s26, 1
          %s165 = smul.addr %s164, 16
          %s166 = scalar_lea.vmem [#allocation3], %s165
          %s168 = ssub.s32 256, 256
          %169 = vsyncadd %s163, %s168
          %s170 = smul.addr %s16, 4
          %s171 = smul.addr %s170, 64
          %s172 = scalar_lea.hbm %s0, %s171
          %s174 = sshll.u32 %s166, 4
          %s175 = int_to_ptr.vmem [resolvable:$true] %s174
          %177 = dma.hbm_to_vmem [thread:$0]  %s172, 256, %s175, %s163
        $region32: #{tpu_custom_call.1} parent=27 // pred_fallthru
          _
      $region28: #{tpu_custom_call.1} parent=5 // pred_fallthru
        _
      %p178 = scmp.le.s32.totalorder 1, %s16
      %p179 = scmp.lt.s32.totalorder %s16, 3
      %p180 = pnand %p178, %p179
      %p181 = pneg %p180
      // Predicated region
      $region33: #{tpu_custom_call.1} parent=5 // pred_check
        _
      $region34: #{tpu_custom_call.1} parent=5 // pred_check_branch
        %183 = sbr.rel (%p180) target = $region36
      $region35: #{tpu_custom_call.1} parent=5 // pred_region
        %s184 = ssub.s32 %s16, 1
        %s185 = sand.u32 %s29, 1
        %s186 = scalar_lea.sflag [#allocation4], %s185
        %s187 = sand.u32 %s29, 1
        %s188 = smul.addr %s187, 16
        %s189 = scalar_lea.vmem [#allocation3], %s188
        // Predicated region
        $region37: #{tpu_custom_call.1} parent=35 // pred_check
          %p190 = pneg %p42
        $region38: #{tpu_custom_call.1} parent=35 // pred_check_branch
          %192 = sbr.rel (%p190) target = $region40
        $region39: #{tpu_custom_call.1} parent=35 // pred_region
          %193 = dma.done %s186, 256
        $region40: #{tpu_custom_call.1} parent=35 // pred_fallthru
          _
        %s194 = sand.u32 %s29, 1
        %s195 = scalar_lea.sflag [#allocation4], %s194
        %s196 = sand.u32 %s29, 1
        %s197 = smul.addr %s196, 16
        %s198 = scalar_lea.vmem [#allocation3], %s197
        %p199 = pneg %p42
        %p200 = pneg %p39
        %p201 = pneg %p63
        %p202 = pneg %p60
        %p203 = pneg %p84
        %p204 = pneg %p81
        %p205 = pneg %p105
        %p206 = pneg %p102
        %p207 = pneg %p131
        %p208 = pneg %p128
        %s209 = sand.u32 %s118, 1
        %s210 = scalar_lea.sflag [#allocation5], %s209
        %s211 = sand.u32 %s118, 1
        %s212 = smul.addr %s211, 24
        %s213 = scalar_lea.vmem [#allocation6], %s212
        %v214 = vld [vmem:[%s1] sm:$0xff]
        %v215 = vld [vmem:[%s2] sm:$0xff]
        %v216 = vld [vmem:[%s3] sm:$0xff]
        %v217 = vld [vmem:[%s189] sm:$0xff]
        %v218 = vld [vmem:[%s189 + $0x8] sm:$0xf]
        %v220 = vcombine.high %v217, %v217
        %222 = vst [vmem:[#allocation2] sm:$0xf] %v217
        %223 = vst [vmem:[#allocation2 + $0x8] sm:$0xf] %v220
        %224 = vst [vmem:[#allocation2 + $0x10] sm:$0xf] %v218
        %v225 = vld [vmem:[%s189] sm:$0xff]
        %v226 = vld [vmem:[%s189 + $0x8] sm:$0xff]
        %v229 = vcombine.low %v225, %v225
        %v230 = vcombine.low %v226, %v226
        %231 = vrot.lane.b32.xlu0 %v229, 127
        %v232 = vpop.permute.xlu0 %231
        %233 = vrot.lane.b32.xlu0 %v225, 127
        %v234 = vpop.permute.xlu0 %233
        %235 = vrot.lane.b32.xlu0 %v230, 127
        %v236 = vpop.permute.xlu0 %235
        %237 = vrot.lane.b32.xlu0 %v226, 127
        %v238 = vpop.permute.xlu0 %237
        %vm239 = vcmask 1039360
        %v240 = vsel %vm239, %v232, %v234
        %v241 = vsel %vm239, %v234, %v236
        %v242 = vsel %vm239, %v236, %v238
        %246 = vst [vmem:[#allocation2] sm:$0xf0] %v240
        %247 = vst [vmem:[#allocation2 + $0x8] sm:$0xf0] %v241
        %248 = vst [vmem:[#allocation2 + $0x10] sm:$0xf0] %v242
        %v249 = vld [vmem:[%s189] sm:$0xff]
        %v250 = vld [vmem:[%s189 + $0x8] sm:$0xff]
        %v253 = vcombine.high %v249, %v249
        %v254 = vcombine.high %v250, %v250
        %255 = vrot.lane.b32.xlu0 %v249, 126
        %v256 = vpop.permute.xlu0 %255
        %257 = vrot.lane.b32.xlu0 %v253, 126
        %v258 = vpop.permute.xlu0 %257
        %259 = vrot.lane.b32.xlu0 %v250, 126
        %v260 = vpop.permute.xlu0 %259
        %261 = vrot.lane.b32.xlu0 %v254, 126
        %v262 = vpop.permute.xlu0 %261
        %vm263 = vcmask 1031168
        %v264 = vsel %vm263, %v256, %v258
        %v265 = vsel %vm263, %v258, %v260
        %v266 = vsel %vm263, %v260, %v262
        %270 = vst [vmem:[#allocation2 + $0x18] sm:$0xf] %v264
        %271 = vst [vmem:[#allocation2 + $0x20] sm:$0xf] %v265
        %272 = vst [vmem:[#allocation2 + $0x28] sm:$0xf] %v266
        %v273 = vld [vmem:[%s189] sm:$0xff]
        %v274 = vld [vmem:[%s189 + $0x8] sm:$0xff]
        %v277 = vcombine.low %v273, %v273
        %v278 = vcombine.low %v274, %v274
        %279 = vrot.lane.b32.xlu0 %v277, 110
        %v280 = vpop.permute.xlu0 %279
        %281 = vrot.lane.b32.xlu0 %v273, 110
        %v282 = vpop.permute.xlu0 %281
        %283 = vrot.lane.b32.xlu0 %v278, 110
        %v284 = vpop.permute.xlu0 %283
        %285 = vrot.lane.b32.xlu0 %v274, 110
        %v286 = vpop.permute.xlu0 %285
        %vm287 = vcmask 900096
        %v288 = vsel %vm287, %v280, %v282
        %v289 = vsel %vm287, %v282, %v284
        %v290 = vsel %vm287, %v284, %v286
        %294 = vst [vmem:[#allocation2 + $0x18] sm:$0xf0] %v288
        %295 = vst [vmem:[#allocation2 + $0x20] sm:$0xf0] %v289
        %296 = vst [vmem:[#allocation2 + $0x28] sm:$0xf0] %v290
        %v297 = vld [vmem:[%s189] sm:$0xff]
        %v298 = vld [vmem:[%s189 + $0x8] sm:$0xff]
        %v301 = vcombine.high %v297, %v297
        %v302 = vcombine.high %v298, %v298
        %303 = vrot.lane.b32.xlu0 %v297, 109
        %v304 = vpop.permute.xlu0 %303
        %305 = vrot.lane.b32.xlu0 %v301, 109
        %v306 = vpop.permute.xlu0 %305
        %307 = vrot.lane.b32.xlu0 %v298, 109
        %v308 = vpop.permute.xlu0 %307
        %309 = vrot.lane.b32.xlu0 %v302, 109
        %v310 = vpop.permute.xlu0 %309
        %vm311 = vcmask 891904
        %v312 = vsel %vm311, %v304, %v306
        %v313 = vsel %vm311, %v306, %v308
        %v314 = vsel %vm311, %v308, %v310
        %318 = vst [vmem:[#allocation2 + $0x30] sm:$0xf] %v312
        %319 = vst [vmem:[#allocation2 + $0x38] sm:$0xf] %v313
        %320 = vst [vmem:[#allocation2 + $0x40] sm:$0xf] %v314
        %v321 = vld [vmem:[%s189] sm:$0xff]
        %v322 = vld [vmem:[%s189 + $0x8] sm:$0xff]
        %v325 = vcombine.low %v321, %v321
        %v326 = vcombine.low %v322, %v322
        %327 = vrot.lane.b32.xlu0 %v325, 108
        %v328 = vpop.permute.xlu0 %327
        %329 = vrot.lane.b32.xlu0 %v321, 108
        %v330 = vpop.permute.xlu0 %329
        %331 = vrot.lane.b32.xlu0 %v326, 108
        %v332 = vpop.permute.xlu0 %331
        %333 = vrot.lane.b32.xlu0 %v322, 108
        %v334 = vpop.permute.xlu0 %333
        %vm335 = vcmask 883712
        %v336 = vsel %vm335, %v328, %v330
        %v337 = vsel %vm335, %v330, %v332
        %v338 = vsel %vm335, %v332, %v334
        %342 = vst [vmem:[#allocation2 + $0x30] sm:$0xf0] %v336
        %343 = vst [vmem:[#allocation2 + $0x38] sm:$0xf0] %v337
        %344 = vst [vmem:[#allocation2 + $0x40] sm:$0xf0] %v338
        %v345 = vld [vmem:[%s189] sm:$0xff]
        %v346 = vld [vmem:[%s189 + $0x8] sm:$0xff]
        %v349 = vcombine.high %v345, %v345
        %v350 = vcombine.high %v346, %v346
        %351 = vrot.lane.b32.xlu0 %v345, 92
        %v352 = vpop.permute.xlu0 %351
        %353 = vrot.lane.b32.xlu0 %v349, 92
        %v354 = vpop.permute.xlu0 %353
        %355 = vrot.lane.b32.xlu0 %v346, 92
        %v356 = vpop.permute.xlu0 %355
        %357 = vrot.lane.b32.xlu0 %v350, 92
        %v358 = vpop.permute.xlu0 %357
        %vm359 = vcmask 752640
        %v360 = vsel %vm359, %v352, %v354
        %v361 = vsel %vm359, %v354, %v356
        %v362 = vsel %vm359, %v356, %v358
        %366 = vst [vmem:[#allocation2 + $0x48] sm:$0xf] %v360
        %367 = vst [vmem:[#allocation2 + $0x50] sm:$0xf] %v361
        %368 = vst [vmem:[#allocation2 + $0x58] sm:$0xf] %v362
        %v369 = vld [vmem:[%s189] sm:$0xff]
        %v370 = vld [vmem:[%s189 + $0x8] sm:$0xff]
        %v373 = vcombine.low %v369, %v369
        %v374 = vcombine.low %v370, %v370
        %375 = vrot.lane.b32.xlu0 %v373, 91
        %v376 = vpop.permute.xlu0 %375
        %377 = vrot.lane.b32.xlu0 %v369, 91
        %v378 = vpop.permute.xlu0 %377
        %379 = vrot.lane.b32.xlu0 %v374, 91
        %v380 = vpop.permute.xlu0 %379
        %381 = vrot.lane.b32.xlu0 %v370, 91
        %v382 = vpop.permute.xlu0 %381
        %vm383 = vcmask 744448
        %v384 = vsel %vm383, %v376, %v378
        %v385 = vsel %vm383, %v378, %v380
        %v386 = vsel %vm383, %v380, %v382
        %390 = vst [vmem:[#allocation2 + $0x48] sm:$0xf0] %v384
        %391 = vst [vmem:[#allocation2 + $0x50] sm:$0xf0] %v385
        %392 = vst [vmem:[#allocation2 + $0x58] sm:$0xf0] %v386
        %v393 = vld [vmem:[%s189] sm:$0xff]
        %v394 = vld [vmem:[%s189 + $0x8] sm:$0xff]
        %v397 = vcombine.high %v393, %v393
        %v398 = vcombine.high %v394, %v394
        %399 = vrot.lane.b32.xlu0 %v393, 90
        %v400 = vpop.permute.xlu0 %399
        %401 = vrot.lane.b32.xlu0 %v397, 90
        %v402 = vpop.permute.xlu0 %401
        %403 = vrot.lane.b32.xlu0 %v394, 90
        %v404 = vpop.permute.xlu0 %403
        %405 = vrot.lane.b32.xlu0 %v398, 90
        %v406 = vpop.permute.xlu0 %405
        %vm407 = vcmask 736256
        %v408 = vsel %vm407, %v400, %v402
        %v409 = vsel %vm407, %v402, %v404
        %v410 = vsel %vm407, %v404, %v406
        %414 = vst [vmem:[#allocation2 + $0x60] sm:$0xf] %v408
        %415 = vst [vmem:[#allocation2 + $0x68] sm:$0xf] %v409
        %416 = vst [vmem:[#allocation2 + $0x70] sm:$0xf] %v410
        %v417 = vld [vmem:[#allocation2] sm:$0xff]
        %v418 = vld [vmem:[#allocation2 + $0x8] sm:$0xff]
        %v419 = vld [vmem:[#allocation2 + $0x10] sm:$0xff]
        %v420 = vld [vmem:[#allocation2 + $0x18] sm:$0xff]
        %v421 = vld [vmem:[#allocation2 + $0x20] sm:$0xff]
        %v422 = vld [vmem:[#allocation2 + $0x28] sm:$0xff]
        %v423 = vld [vmem:[#allocation2 + $0x30] sm:$0xff]
        %v424 = vld [vmem:[#allocation2 + $0x38] sm:$0xff]
        %v425 = vld [vmem:[#allocation2 + $0x40] sm:$0xff]
        %v426 = vld [vmem:[#allocation2 + $0x48] sm:$0xff]
        %v427 = vld [vmem:[#allocation2 + $0x50] sm:$0xff]
        %v428 = vld [vmem:[#allocation2 + $0x58] sm:$0xff]
        %v429 = vld [vmem:[#allocation2 + $0x60] sm:$0xf]
        %v430 = vld [vmem:[#allocation2 + $0x68] sm:$0xf]
        %v431 = vld [vmem:[#allocation2 + $0x70] sm:$0xf]
        %vm432 = vcmask 293888
        %v434 = vsel %vm432, %v214, 0
        %vm436 = vcmask 1043456
        %v438 = vsel %vm436, %v429, 0
        %v441 = vsel %vm436, %v430, 0
        %v444 = vsel %vm436, %v431, 0
        %v446 = vand.u32 %v418, 4294901760
        %447 = vmatprep.subr.mxu0 %v446
        %v448 = vand.u32 %v417, 4294901760
        %449 = vmatpush1.msra.mxu0 %v448
        %v450 = vand.u32 %v421, 4294901760
        %451 = vmatprep.subr.mxu0 %v450
        %v452 = vand.u32 %v420, 4294901760
        %453 = vmatpush1.msra.mxu0 %v452
        %v454 = vand.u32 %v424, 4294901760
        %455 = vmatprep.subr.mxu0 %v454
        %v456 = vand.u32 %v423, 4294901760
        %457 = vmatpush1.msra.mxu0 %v456
        %v458 = vand.u32 %v427, 4294901760
        %459 = vmatprep.subr.mxu0 %v458
        %v460 = vand.u32 %v426, 4294901760
        %461 = vmatpush1.msra.mxu0 %v460
        %v462 = vand.u32 %v441, 4294901760
        %463 = vmatprep.subr.mxu0 %v462
        %v464 = vand.u32 %v438, 4294901760
        %465 = vmatpush1.msra.mxu0 %v464
        %466 = vmatprep.subr.mxu0 0.0
        %467 = vmatpush1.msra.mxu0 0.0
        %468 = vmatprep.subr.mxu0 0.0
        %469 = vmatpush1.msra.mxu0 0.0
        %470 = vmatprep.subr.mxu0 0.0
        %471 = vmatpush1.msra.mxu0 0.0
        %472 = vmatprep.subr.mxu0 0.0
        %473 = vmatpush1.msra.mxu0 0.0
        %474 = vmatprep.subr.mxu0 0.0
        %475 = vmatpush1.msra.mxu0 0.0
        %476 = vmatprep.subr.mxu0 0.0
        %477 = vmatpush1.msra.mxu0 0.0
        %478 = vmatprep.subr.mxu0 0.0
        %479 = vmatpush1.msra.mxu0 0.0
        %480 = vmatprep.subr.mxu0 0.0
        %481 = vmatpush1.msra.mxu0 0.0
        %482 = vmatprep.subr.mxu0 0.0
        %483 = vmatpush1.msra.mxu0 0.0
        %484 = vmatprep.subr.mxu0 0.0
        %485 = vmatpush1.msra.mxu0 0.0
        %486 = vmatprep.subr.mxu0 0.0
        %487 = vmatpush1.msra.mxu0 0.0
        %488 = vmatprep.subr.mxu0 0.0
        %489 = vmatpush1.msra.mxu0 0.0
        %490 = vmatprep.subr.mxu0 0.0
        %491 = vmatpush1.msra.mxu0 0.0
        %492 = vmatprep.subr.mxu0 0.0
        %493 = vmatpush1.msra.mxu0 0.0
        %494 = vmatprep.subr.mxu0 0.0
        %495 = vmatpush1.msra.mxu0 0.0
        %496 = vmatprep.subr.mxu0 0.0
        %497 = vmatpush1.msra.mxu0 0.0
        %498 = vmatprep.subr.mxu0 0.0
        %499 = vmatpush1.msra.mxu0 0.0
        %500 = vmatprep.subr.mxu0 0.0
        %501 = vmatpush1.msra.mxu0 0.0
        %502 = vmatprep.subr.mxu0 0.0
        %503 = vmatpush1.msra.mxu0 0.0
        %504 = vmatprep.subr.mxu0 0.0
        %505 = vmatpush1.msra.mxu0 0.0
        %506 = vmatprep.subr.mxu0 0.0
        %507 = vmatpush1.msra.mxu0 0.0
        %508 = vmatprep.subr.mxu0 0.0
        %509 = vmatpush1.msra.mxu0 0.0
        %510 = vmatprep.subr.mxu0 0.0
        %511 = vmatpush1.msra.mxu0 0.0
        %512 = vmatprep.subr.mxu0 0.0
        %513 = vmatpush1.msra.mxu0 0.0
        %514 = vmatprep.subr.mxu0 0.0
        %515 = vmatpush1.msra.mxu0 0.0
        %516 = vmatprep.subr.mxu0 0.0
        %517 = vmatpush1.msra.mxu0 0.0
        %518 = vmatprep.subr.mxu0 0.0
        %519 = vmatpush1.msra.mxu0 0.0
        %520 = vmatprep.mubr.f32.mxu0 0.0
        %v521 = vand.u32 %v434, 4294901760
        %v522 = vsub.f32 %v434, %v521
        %v523 = vand.u32 %v522, 4294901760
        %v524 = vsub.f32 %v522, %v523
        %v525 = vand.u32 %v524, 4294901760
        %526 = vmatmul.mubr.f32.gmra.mrb[0].mxu0 %v525
        %v527 = vpop.f32.mrb[0].mxu0
        %v528 = vadd.f32 0.0, %v527
        %v529 = vpop.f32.mrb[0].mxu0
        %v530 = vadd.f32 0.0, %v529
        %531 = vdwg.mxu0
        %v532 = vand.u32 %v418, 4294901760
        %v533 = vsub.f32 %v418, %v532
        %v534 = vand.u32 %v533, 4294901760
        %v535 = vsub.f32 %v533, %v534
        %v536 = vand.u32 %v535, 4294901760
        %537 = vmatprep.subr.mxu0 %v536
        %v538 = vand.u32 %v417, 4294901760
        %v539 = vsub.f32 %v417, %v538
        %v540 = vand.u32 %v539, 4294901760
        %v541 = vsub.f32 %v539, %v540
        %v542 = vand.u32 %v541, 4294901760
        %543 = vmatpush1.msra.mxu0 %v542
        %v544 = vand.u32 %v421, 4294901760
        %v545 = vsub.f32 %v421, %v544
        %v546 = vand.u32 %v545, 4294901760
        %v547 = vsub.f32 %v545, %v546
        %v548 = vand.u32 %v547, 4294901760
        %549 = vmatprep.subr.mxu0 %v548
        %v550 = vand.u32 %v420, 4294901760
        %v551 = vsub.f32 %v420, %v550
        %v552 = vand.u32 %v551, 4294901760
        %v553 = vsub.f32 %v551, %v552
        %v554 = vand.u32 %v553, 4294901760
        %555 = vmatpush1.msra.mxu0 %v554
        %v556 = vand.u32 %v424, 4294901760
        %v557 = vsub.f32 %v424, %v556
        %v558 = vand.u32 %v557, 4294901760
        %v559 = vsub.f32 %v557, %v558
        %v560 = vand.u32 %v559, 4294901760
        %561 = vmatprep.subr.mxu0 %v560
        %v562 = vand.u32 %v423, 4294901760
        %v563 = vsub.f32 %v423, %v562
        %v564 = vand.u32 %v563, 4294901760
        %v565 = vsub.f32 %v563, %v564
        %v566 = vand.u32 %v565, 4294901760
        %567 = vmatpush1.msra.mxu0 %v566
        %v568 = vand.u32 %v427, 4294901760
        %v569 = vsub.f32 %v427, %v568
        %v570 = vand.u32 %v569, 4294901760
        %v571 = vsub.f32 %v569, %v570
        %v572 = vand.u32 %v571, 4294901760
        %573 = vmatprep.subr.mxu0 %v572
        %v574 = vand.u32 %v426, 4294901760
        %v575 = vsub.f32 %v426, %v574
        %v576 = vand.u32 %v575, 4294901760
        %v577 = vsub.f32 %v575, %v576
        %v578 = vand.u32 %v577, 4294901760
        %579 = vmatpush1.msra.mxu0 %v578
        %v580 = vand.u32 %v441, 4294901760
        %v581 = vsub.f32 %v441, %v580
        %v582 = vand.u32 %v581, 4294901760
        %v583 = vsub.f32 %v581, %v582
        %v584 = vand.u32 %v583, 4294901760
        %585 = vmatprep.subr.mxu0 %v584
        %v586 = vand.u32 %v438, 4294901760
        %v587 = vsub.f32 %v438, %v586
        %v588 = vand.u32 %v587, 4294901760
        %v589 = vsub.f32 %v587, %v588
        %v590 = vand.u32 %v589, 4294901760
        %591 = vmatpush1.msra.mxu0 %v590
        %592 = vmatprep.subr.mxu0 0.0
        %593 = vmatpush1.msra.mxu0 0.0
        %594 = vmatprep.subr.mxu0 0.0
        %595 = vmatpush1.msra.mxu0 0.0
        %596 = vmatprep.subr.mxu0 0.0
        %597 = vmatpush1.msra.mxu0 0.0
        %598 = vmatprep.subr.mxu0 0.0
        %599 = vmatpush1.msra.mxu0 0.0
        %600 = vmatprep.subr.mxu0 0.0
        %601 = vmatpush1.msra.mxu0 0.0
        %602 = vmatprep.subr.mxu0 0.0
        %603 = vmatpush1.msra.mxu0 0.0
        %604 = vmatprep.subr.mxu0 0.0
        %605 = vmatpush1.msra.mxu0 0.0
        %606 = vmatprep.subr.mxu0 0.0
        %607 = vmatpush1.msra.mxu0 0.0
        %608 = vmatprep.subr.mxu0 0.0
        %609 = vmatpush1.msra.mxu0 0.0
        %610 = vmatprep.subr.mxu0 0.0
        %611 = vmatpush1.msra.mxu0 0.0
        %612 = vmatprep.subr.mxu0 0.0
        %613 = vmatpush1.msra.mxu0 0.0
        %614 = vmatprep.subr.mxu0 0.0
        %615 = vmatpush1.msra.mxu0 0.0
        %616 = vmatprep.subr.mxu0 0.0
        %617 = vmatpush1.msra.mxu0 0.0
        %618 = vmatprep.subr.mxu0 0.0
        %619 = vmatpush1.msra.mxu0 0.0
        %620 = vmatprep.subr.mxu0 0.0
        %621 = vmatpush1.msra.mxu0 0.0
        %622 = vmatprep.subr.mxu0 0.0
        %623 = vmatpush1.msra.mxu0 0.0
        %624 = vmatprep.subr.mxu0 0.0
        %625 = vmatpush1.msra.mxu0 0.0
        %626 = vmatprep.subr.mxu0 0.0
        %627 = vmatpush1.msra.mxu0 0.0
        %628 = vmatprep.subr.mxu0 0.0
        %629 = vmatpush1.msra.mxu0 0.0
        %630 = vmatprep.subr.mxu0 0.0
        %631 = vmatpush1.msra.mxu0 0.0
        %632 = vmatprep.subr.mxu0 0.0
        %633 = vmatpush1.msra.mxu0 0.0
        %634 = vmatprep.subr.mxu0 0.0
        %635 = vmatpush1.msra.mxu0 0.0
        %636 = vmatprep.subr.mxu0 0.0
        %637 = vmatpush1.msra.mxu0 0.0
        %638 = vmatprep.subr.mxu0 0.0
        %639 = vmatpush1.msra.mxu0 0.0
        %640 = vmatprep.subr.mxu0 0.0
        %641 = vmatpush1.msra.mxu0 0.0
        %642 = vmatprep.subr.mxu0 0.0
        %643 = vmatpush1.msra.mxu0 0.0
        %644 = vmatprep.subr.mxu0 0.0
        %645 = vmatpush1.msra.mxu0 0.0
        %646 = vmatprep.mubr.f32.mxu0 0.0
        %v647 = vand.u32 %v434, 4294901760
        %648 = vmatmul.mubr.f32.gmra.mrb[0].mxu0 %v647
        %v649 = vpop.f32.mrb[0].mxu0
        %v650 = vadd.f32 %v528, %v649
        %v651 = vpop.f32.mrb[0].mxu0
        %v652 = vadd.f32 %v530, %v651
        %653 = vdwg.mxu0
        %v654 = vand.u32 %v418, 4294901760
        %v655 = vsub.f32 %v418, %v654
        %656 = vmatprep.subr.mxu0 %v655
        %v657 = vand.u32 %v417, 4294901760
        %v658 = vsub.f32 %v417, %v657
        %659 = vmatpush1.msra.mxu0 %v658
        %v660 = vand.u32 %v421, 4294901760
        %v661 = vsub.f32 %v421, %v660
        %662 = vmatprep.subr.mxu0 %v661
        %v663 = vand.u32 %v420, 4294901760
        %v664 = vsub.f32 %v420, %v663
        %665 = vmatpush1.msra.mxu0 %v664
        %v666 = vand.u32 %v424, 4294901760
        %v667 = vsub.f32 %v424, %v666
        %668 = vmatprep.subr.mxu0 %v667
        %v669 = vand.u32 %v423, 4294901760
        %v670 = vsub.f32 %v423, %v669
        %671 = vmatpush1.msra.mxu0 %v670
        %v672 = vand.u32 %v427, 4294901760
        %v673 = vsub.f32 %v427, %v672
        %674 = vmatprep.subr.mxu0 %v673
        %v675 = vand.u32 %v426, 4294901760
        %v676 = vsub.f32 %v426, %v675
        %677 = vmatpush1.msra.mxu0 %v676
        %v678 = vand.u32 %v441, 4294901760
        %v679 = vsub.f32 %v441, %v678
        %680 = vmatprep.subr.mxu0 %v679
        %v681 = vand.u32 %v438, 4294901760
        %v682 = vsub.f32 %v438, %v681
        %683 = vmatpush1.msra.mxu0 %v682
        %684 = vmatprep.subr.mxu0 0.0
        %685 = vmatpush1.msra.mxu0 0.0
        %686 = vmatprep.subr.mxu0 0.0
        %687 = vmatpush1.msra.mxu0 0.0
        %688 = vmatprep.subr.mxu0 0.0
        %689 = vmatpush1.msra.mxu0 0.0
        %690 = vmatprep.subr.mxu0 0.0
        %691 = vmatpush1.msra.mxu0 0.0
        %692 = vmatprep.subr.mxu0 0.0
        %693 = vmatpush1.msra.mxu0 0.0
        %694 = vmatprep.subr.mxu0 0.0
        %695 = vmatpush1.msra.mxu0 0.0
        %696 = vmatprep.subr.mxu0 0.0
        %697 = vmatpush1.msra.mxu0 0.0
        %698 = vmatprep.subr.mxu0 0.0
        %699 = vmatpush1.msra.mxu0 0.0
        %700 = vmatprep.subr.mxu0 0.0
        %701 = vmatpush1.msra.mxu0 0.0
        %702 = vmatprep.subr.mxu0 0.0
        %703 = vmatpush1.msra.mxu0 0.0
        %704 = vmatprep.subr.mxu0 0.0
        %705 = vmatpush1.msra.mxu0 0.0
        %706 = vmatprep.subr.mxu0 0.0
        %707 = vmatpush1.msra.mxu0 0.0
        %708 = vmatprep.subr.mxu0 0.0
        %709 = vmatpush1.msra.mxu0 0.0
        %710 = vmatprep.subr.mxu0 0.0
        %711 = vmatpush1.msra.mxu0 0.0
        %712 = vmatprep.subr.mxu0 0.0
        %713 = vmatpush1.msra.mxu0 0.0
        %714 = vmatprep.subr.mxu0 0.0
        %715 = vmatpush1.msra.mxu0 0.0
        %716 = vmatprep.subr.mxu0 0.0
        %717 = vmatpush1.msra.mxu0 0.0
        %718 = vmatprep.subr.mxu0 0.0
        %719 = vmatpush1.msra.mxu0 0.0
        %720 = vmatprep.subr.mxu0 0.0
        %721 = vmatpush1.msra.mxu0 0.0
        %722 = vmatprep.subr.mxu0 0.0
        %723 = vmatpush1.msra.mxu0 0.0
        %724 = vmatprep.subr.mxu0 0.0
        %725 = vmatpush1.msra.mxu0 0.0
        %726 = vmatprep.subr.mxu0 0.0
        %727 = vmatpush1.msra.mxu0 0.0
        %728 = vmatprep.subr.mxu0 0.0
        %729 = vmatpush1.msra.mxu0 0.0
        %730 = vmatprep.subr.mxu0 0.0
        %731 = vmatpush1.msra.mxu0 0.0
        %732 = vmatprep.subr.mxu0 0.0
        %733 = vmatpush1.msra.mxu0 0.0
        %734 = vmatprep.subr.mxu0 0.0
        %735 = vmatpush1.msra.mxu0 0.0
        %736 = vmatprep.subr.mxu0 0.0
        %737 = vmatpush1.msra.mxu0 0.0
        %738 = vmatprep.mubr.f32.mxu0 0.0
        %v739 = vand.u32 %v434, 4294901760
        %v740 = vsub.f32 %v434, %v739
        %741 = vmatmul.mubr.f32.gmra.mrb[0].mxu0 %v740
        %v742 = vpop.f32.mrb[0].mxu0
        %v743 = vadd.f32 %v650, %v742
        %v744 = vpop.f32.mrb[0].mxu0
        %v745 = vadd.f32 %v652, %v744
        %746 = vdwg.mxu0
        %v747 = vand.u32 %v418, 4294901760
        %748 = vmatprep.subr.mxu0 %v747
        %v749 = vand.u32 %v417, 4294901760
        %750 = vmatpush1.msra.mxu0 %v749
        %v751 = vand.u32 %v421, 4294901760
        %752 = vmatprep.subr.mxu0 %v751
        %v753 = vand.u32 %v420, 4294901760
        %754 = vmatpush1.msra.mxu0 %v753
        %v755 = vand.u32 %v424, 4294901760
        %756 = vmatprep.subr.mxu0 %v755
        %v757 = vand.u32 %v423, 4294901760
        %758 = vmatpush1.msra.mxu0 %v757
        %v759 = vand.u32 %v427, 4294901760
        %760 = vmatprep.subr.mxu0 %v759
        %v761 = vand.u32 %v426, 4294901760
        %762 = vmatpush1.msra.mxu0 %v761
        %v763 = vand.u32 %v441, 4294901760
        %764 = vmatprep.subr.mxu0 %v763
        %v765 = vand.u32 %v438, 4294901760
        %766 = vmatpush1.msra.mxu0 %v765
        %767 = vmatprep.subr.mxu0 0.0
        %768 = vmatpush1.msra.mxu0 0.0
        %769 = vmatprep.subr.mxu0 0.0
        %770 = vmatpush1.msra.mxu0 0.0
        %771 = vmatprep.subr.mxu0 0.0
        %772 = vmatpush1.msra.mxu0 0.0
        %773 = vmatprep.subr.mxu0 0.0
        %774 = vmatpush1.msra.mxu0 0.0
        %775 = vmatprep.subr.mxu0 0.0
        %776 = vmatpush1.msra.mxu0 0.0
        %777 = vmatprep.subr.mxu0 0.0
        %778 = vmatpush1.msra.mxu0 0.0
        %779 = vmatprep.subr.mxu0 0.0
        %780 = vmatpush1.msra.mxu0 0.0
        %781 = vmatprep.subr.mxu0 0.0
        %782 = vmatpush1.msra.mxu0 0.0
        %783 = vmatprep.subr.mxu0 0.0
        %784 = vmatpush1.msra.mxu0 0.0
        %785 = vmatprep.subr.mxu0 0.0
        %786 = vmatpush1.msra.mxu0 0.0
        %787 = vmatprep.subr.mxu0 0.0
        %788 = vmatpush1.msra.mxu0 0.0
        %789 = vmatprep.subr.mxu0 0.0
        %790 = vmatpush1.msra.mxu0 0.0
        %791 = vmatprep.subr.mxu0 0.0
        %792 = vmatpush1.msra.mxu0 0.0
        %793 = vmatprep.subr.mxu0 0.0
        %794 = vmatpush1.msra.mxu0 0.0
        %795 = vmatprep.subr.mxu0 0.0
        %796 = vmatpush1.msra.mxu0 0.0
        %797 = vmatprep.subr.mxu0 0.0
        %798 = vmatpush1.msra.mxu0 0.0
        %799 = vmatprep.subr.mxu0 0.0
        %800 = vmatpush1.msra.mxu0 0.0
        %801 = vmatprep.subr.mxu0 0.0
        %802 = vmatpush1.msra.mxu0 0.0
        %803 = vmatprep.subr.mxu0 0.0
        %804 = vmatpush1.msra.mxu0 0.0
        %805 = vmatprep.subr.mxu0 0.0
        %806 = vmatpush1.msra.mxu0 0.0
        %807 = vmatprep.subr.mxu0 0.0
        %808 = vmatpush1.msra.mxu0 0.0
        %809 = vmatprep.subr.mxu0 0.0
        %810 = vmatpush1.msra.mxu0 0.0
        %811 = vmatprep.subr.mxu0 0.0
        %812 = vmatpush1.msra.mxu0 0.0
        %813 = vmatprep.subr.mxu0 0.0
        %814 = vmatpush1.msra.mxu0 0.0
        %815 = vmatprep.subr.mxu0 0.0
        %816 = vmatpush1.msra.mxu0 0.0
        %817 = vmatprep.subr.mxu0 0.0
        %818 = vmatpush1.msra.mxu0 0.0
        %819 = vmatprep.subr.mxu0 0.0
        %820 = vmatpush1.msra.mxu0 0.0
        %821 = vmatprep.mubr.f32.mxu0 0.0
        %v822 = vand.u32 %v434, 4294901760
        %v823 = vsub.f32 %v434, %v822
        %v824 = vand.u32 %v823, 4294901760
        %825 = vmatmul.mubr.f32.gmra.mrb[0].mxu0 %v824
        %v826 = vpop.f32.mrb[0].mxu0
        %v827 = vadd.f32 %v743, %v826
        %v828 = vpop.f32.mrb[0].mxu0
        %v829 = vadd.f32 %v745, %v828
        %830 = vdwg.mxu0
        %v831 = vand.u32 %v418, 4294901760
        %v832 = vsub.f32 %v418, %v831
        %v833 = vand.u32 %v832, 4294901760
        %834 = vmatprep.subr.mxu0 %v833
        %v835 = vand.u32 %v417, 4294901760
        %v836 = vsub.f32 %v417, %v835
        %v837 = vand.u32 %v836, 4294901760
        %838 = vmatpush1.msra.mxu0 %v837
        %v839 = vand.u32 %v421, 4294901760
        %v840 = vsub.f32 %v421, %v839
        %v841 = vand.u32 %v840, 4294901760
        %842 = vmatprep.subr.mxu0 %v841
        %v843 = vand.u32 %v420, 4294901760
        %v844 = vsub.f32 %v420, %v843
        %v845 = vand.u32 %v844, 4294901760
        %846 = vmatpush1.msra.mxu0 %v845
        %v847 = vand.u32 %v424, 4294901760
        %v848 = vsub.f32 %v424, %v847
        %v849 = vand.u32 %v848, 4294901760
        %850 = vmatprep.subr.mxu0 %v849
        %v851 = vand.u32 %v423, 4294901760
        %v852 = vsub.f32 %v423, %v851
        %v853 = vand.u32 %v852, 4294901760
        %854 = vmatpush1.msra.mxu0 %v853
        %v855 = vand.u32 %v427, 4294901760
        %v856 = vsub.f32 %v427, %v855
        %v857 = vand.u32 %v856, 4294901760
        %858 = vmatprep.subr.mxu0 %v857
        %v859 = vand.u32 %v426, 4294901760
        %v860 = vsub.f32 %v426, %v859
        %v861 = vand.u32 %v860, 4294901760
        %862 = vmatpush1.msra.mxu0 %v861
        %v863 = vand.u32 %v441, 4294901760
        %v864 = vsub.f32 %v441, %v863
        %v865 = vand.u32 %v864, 4294901760
        %866 = vmatprep.subr.mxu0 %v865
        %v867 = vand.u32 %v438, 4294901760
        %v868 = vsub.f32 %v438, %v867
        %v869 = vand.u32 %v868, 4294901760
        %870 = vmatpush1.msra.mxu0 %v869
        %871 = vmatprep.subr.mxu0 0.0
        %872 = vmatpush1.msra.mxu0 0.0
        %873 = vmatprep.subr.mxu0 0.0
        %874 = vmatpush1.msra.mxu0 0.0
        %875 = vmatprep.subr.mxu0 0.0
        %876 = vmatpush1.msra.mxu0 0.0
        %877 = vmatprep.subr.mxu0 0.0
        %878 = vmatpush1.msra.mxu0 0.0
        %879 = vmatprep.subr.mxu0 0.0
        %880 = vmatpush1.msra.mxu0 0.0
        %881 = vmatprep.subr.mxu0 0.0
        %882 = vmatpush1.msra.mxu0 0.0
        %883 = vmatprep.subr.mxu0 0.0
        %884 = vmatpush1.msra.mxu0 0.0
        %885 = vmatprep.subr.mxu0 0.0
        %886 = vmatpush1.msra.mxu0 0.0
        %887 = vmatprep.subr.mxu0 0.0
        %888 = vmatpush1.msra.mxu0 0.0
        %889 = vmatprep.subr.mxu0 0.0
        %890 = vmatpush1.msra.mxu0 0.0
        %891 = vmatprep.subr.mxu0 0.0
        %892 = vmatpush1.msra.mxu0 0.0
        %893 = vmatprep.subr.mxu0 0.0
        %894 = vmatpush1.msra.mxu0 0.0
        %895 = vmatprep.subr.mxu0 0.0
        %896 = vmatpush1.msra.mxu0 0.0
        %897 = vmatprep.subr.mxu0 0.0
        %898 = vmatpush1.msra.mxu0 0.0
        %899 = vmatprep.subr.mxu0 0.0
        %900 = vmatpush1.msra.mxu0 0.0
        %901 = vmatprep.subr.mxu0 0.0
        %902 = vmatpush1.msra.mxu0 0.0
        %903 = vmatprep.subr.mxu0 0.0
        %904 = vmatpush1.msra.mxu0 0.0
        %905 = vmatprep.subr.mxu0 0.0
        %906 = vmatpush1.msra.mxu0 0.0
        %907 = vmatprep.subr.mxu0 0.0
        %908 = vmatpush1.msra.mxu0 0.0
        %909 = vmatprep.subr.mxu0 0.0
        %910 = vmatpush1.msra.mxu0 0.0
        %911 = vmatprep.subr.mxu0 0.0
        %912 = vmatpush1.msra.mxu0 0.0
        %913 = vmatprep.subr.mxu0 0.0
        %914 = vmatpush1.msra.mxu0 0.0
        %915 = vmatprep.subr.mxu0 0.0
        %916 = vmatpush1.msra.mxu0 0.0
        %917 = vmatprep.subr.mxu0 0.0
        %918 = vmatpush1.msra.mxu0 0.0
        %919 = vmatprep.subr.mxu0 0.0
        %920 = vmatpush1.msra.mxu0 0.0
        %921 = vmatprep.subr.mxu0 0.0
        %922 = vmatpush1.msra.mxu0 0.0
        %923 = vmatprep.subr.mxu0 0.0
        %924 = vmatpush1.msra.mxu0 0.0
        %925 = vmatprep.mubr.f32.mxu0 0.0
        %v926 = vand.u32 %v434, 4294901760
        %927 = vmatmul.mubr.f32.gmra.mrb[0].mxu0 %v926
        %v928 = vpop.f32.mrb[0].mxu0
        %v929 = vadd.f32 %v827, %v928
        %v930 = vpop.f32.mrb[0].mxu0
        %v931 = vadd.f32 %v829, %v930
        %932 = vdwg.mxu0
        %v933 = vand.u32 %v418, 4294901760
        %934 = vmatprep.subr.mxu0 %v933
        %v935 = vand.u32 %v417, 4294901760
        %936 = vmatpush1.msra.mxu0 %v935
        %v937 = vand.u32 %v421, 4294901760
        %938 = vmatprep.subr.mxu0 %v937
        %v939 = vand.u32 %v420, 4294901760
        %940 = vmatpush1.msra.mxu0 %v939
        %v941 = vand.u32 %v424, 4294901760
        %942 = vmatprep.subr.mxu0 %v941
        %v943 = vand.u32 %v423, 4294901760
        %944 = vmatpush1.msra.mxu0 %v943
        %v945 = vand.u32 %v427, 4294901760
        %946 = vmatprep.subr.mxu0 %v945
        %v947 = vand.u32 %v426, 4294901760
        %948 = vmatpush1.msra.mxu0 %v947
        %v949 = vand.u32 %v441, 4294901760
        %950 = vmatprep.subr.mxu0 %v949
        %v951 = vand.u32 %v438, 4294901760
        %952 = vmatpush1.msra.mxu0 %v951
        %953 = vmatprep.subr.mxu0 0.0
        %954 = vmatpush1.msra.mxu0 0.0
        %955 = vmatprep.subr.mxu0 0.0
        %956 = vmatpush1.msra.mxu0 0.0
        %957 = vmatprep.subr.mxu0 0.0
        %958 = vmatpush1.msra.mxu0 0.0
        %959 = vmatprep.subr.mxu0 0.0
        %960 = vmatpush1.msra.mxu0 0.0
        %961 = vmatprep.subr.mxu0 0.0
        %962 = vmatpush1.msra.mxu0 0.0
        %963 = vmatprep.subr.mxu0 0.0
        %964 = vmatpush1.msra.mxu0 0.0
        %965 = vmatprep.subr.mxu0 0.0
        %966 = vmatpush1.msra.mxu0 0.0
        %967 = vmatprep.subr.mxu0 0.0
        %968 = vmatpush1.msra.mxu0 0.0
        %969 = vmatprep.subr.mxu0 0.0
        %970 = vmatpush1.msra.mxu0 0.0
        %971 = vmatprep.subr.mxu0 0.0
        %972 = vmatpush1.msra.mxu0 0.0
        %973 = vmatprep.subr.mxu0 0.0
        %974 = vmatpush1.msra.mxu0 0.0
        %975 = vmatprep.subr.mxu0 0.0
        %976 = vmatpush1.msra.mxu0 0.0
        %977 = vmatprep.subr.mxu0 0.0
        %978 = vmatpush1.msra.mxu0 0.0
        %979 = vmatprep.subr.mxu0 0.0
        %980 = vmatpush1.msra.mxu0 0.0
        %981 = vmatprep.subr.mxu0 0.0
        %982 = vmatpush1.msra.mxu0 0.0
        %983 = vmatprep.subr.mxu0 0.0
        %984 = vmatpush1.msra.mxu0 0.0
        %985 = vmatprep.subr.mxu0 0.0
        %986 = vmatpush1.msra.mxu0 0.0
        %987 = vmatprep.subr.mxu0 0.0
        %988 = vmatpush1.msra.mxu0 0.0
        %989 = vmatprep.subr.mxu0 0.0
        %990 = vmatpush1.msra.mxu0 0.0
        %991 = vmatprep.subr.mxu0 0.0
        %992 = vmatpush1.msra.mxu0 0.0
        %993 = vmatprep.subr.mxu0 0.0
        %994 = vmatpush1.msra.mxu0 0.0
        %995 = vmatprep.subr.mxu0 0.0
        %996 = vmatpush1.msra.mxu0 0.0
        %997 = vmatprep.subr.mxu0 0.0
        %998 = vmatpush1.msra.mxu0 0.0
        %999 = vmatprep.subr.mxu0 0.0
        %1000 = vmatpush1.msra.mxu0 0.0
        %1001 = vmatprep.subr.mxu0 0.0
        %1002 = vmatpush1.msra.mxu0 0.0
        %1003 = vmatprep.subr.mxu0 0.0
        %1004 = vmatpush1.msra.mxu0 0.0
        %1005 = vmatprep.subr.mxu0 0.0
        %1006 = vmatpush1.msra.mxu0 0.0
        %1007 = vmatprep.mubr.f32.mxu0 0.0
        %v1008 = vand.u32 %v434, 4294901760
        %1009 = vmatmul.mubr.f32.gmra.mrb[0].mxu0 %v1008
        %v1010 = vpop.f32.mrb[0].mxu0
        %v1011 = vadd.f32 %v929, %v1010
        %v1012 = vpop.f32.mrb[0].mxu0
        %v1013 = vadd.f32 %v931, %v1012
        %1014 = vdwg.mxu0
        %1015 = vmatprep.subr.mxu0 0.0
        %v1016 = vand.u32 %v419, 4294901760
        %1017 = vmatpush1.msra.mxu0 %v1016
        %1018 = vmatprep.subr.mxu0 0.0
        %v1019 = vand.u32 %v422, 4294901760
        %1020 = vmatpush1.msra.mxu0 %v1019
        %1021 = vmatprep.subr.mxu0 0.0
        %v1022 = vand.u32 %v425, 4294901760
        %1023 = vmatpush1.msra.mxu0 %v1022
        %1024 = vmatprep.subr.mxu0 0.0
        %v1025 = vand.u32 %v428, 4294901760
        %1026 = vmatpush1.msra.mxu0 %v1025
        %1027 = vmatprep.subr.mxu0 0.0
        %v1028 = vand.u32 %v444, 4294901760
        %1029 = vmatpush1.msra.mxu0 %v1028
        %1030 = vmatprep.subr.mxu0 0.0
        %1031 = vmatpush1.msra.mxu0 0.0
        %1032 = vmatprep.subr.mxu0 0.0
        %1033 = vmatpush1.msra.mxu0 0.0
        %1034 = vmatprep.subr.mxu0 0.0
        %1035 = vmatpush1.msra.mxu0 0.0
        %1036 = vmatprep.subr.mxu0 0.0
        %1037 = vmatpush1.msra.mxu0 0.0
        %1038 = vmatprep.subr.mxu0 0.0
        %1039 = vmatpush1.msra.mxu0 0.0
        %1040 = vmatprep.subr.mxu0 0.0
        %1041 = vmatpush1.msra.mxu0 0.0
        %1042 = vmatprep.subr.mxu0 0.0
        %1043 = vmatpush1.msra.mxu0 0.0
        %1044 = vmatprep.subr.mxu0 0.0
        %1045 = vmatpush1.msra.mxu0 0.0
        %1046 = vmatprep.subr.mxu0 0.0
        %1047 = vmatpush1.msra.mxu0 0.0
        %1048 = vmatprep.subr.mxu0 0.0
        %1049 = vmatpush1.msra.mxu0 0.0
        %1050 = vmatprep.subr.mxu0 0.0
        %1051 = vmatpush1.msra.mxu0 0.0
        %1052 = vmatprep.subr.mxu0 0.0
        %1053 = vmatpush1.msra.mxu0 0.0
        %1054 = vmatprep.subr.mxu0 0.0
        %1055 = vmatpush1.msra.mxu0 0.0
        %1056 = vmatprep.subr.mxu0 0.0
        %1057 = vmatpush1.msra.mxu0 0.0
        %1058 = vmatprep.subr.mxu0 0.0
        %1059 = vmatpush1.msra.mxu0 0.0
        %1060 = vmatprep.subr.mxu0 0.0
        %1061 = vmatpush1.msra.mxu0 0.0
        %1062 = vmatprep.subr.mxu0 0.0
        %1063 = vmatpush1.msra.mxu0 0.0
        %1064 = vmatprep.subr.mxu0 0.0
        %1065 = vmatpush1.msra.mxu0 0.0
        %1066 = vmatprep.subr.mxu0 0.0
        %1067 = vmatpush1.msra.mxu0 0.0
        %1068 = vmatprep.subr.mxu0 0.0
        %1069 = vmatpush1.msra.mxu0 0.0
        %1070 = vmatprep.subr.mxu0 0.0
        %1071 = vmatpush1.msra.mxu0 0.0
        %1072 = vmatprep.subr.mxu0 0.0
        %1073 = vmatpush1.msra.mxu0 0.0
        %1074 = vmatprep.subr.mxu0 0.0
        %1075 = vmatpush1.msra.mxu0 0.0
        %1076 = vmatprep.subr.mxu0 0.0
        %1077 = vmatpush1.msra.mxu0 0.0
        %1078 = vmatprep.subr.mxu0 0.0
        %1079 = vmatpush1.msra.mxu0 0.0
        %1080 = vmatprep.subr.mxu0 0.0
        %1081 = vmatpush1.msra.mxu0 0.0
        %1082 = vmatprep.subr.mxu0 0.0
        %1083 = vmatpush1.msra.mxu0 0.0
        %1084 = vmatprep.mubr.f32.mxu0 0.0
        %v1085 = vand.u32 %v434, 4294901760
        %v1086 = vsub.f32 %v434, %v1085
        %v1087 = vand.u32 %v1086, 4294901760
        %v1088 = vsub.f32 %v1086, %v1087
        %v1089 = vand.u32 %v1088, 4294901760
        %1090 = vmatmul.mubr.f32.gmra.mrb[0].mxu0 %v1089
        %v1091 = vpop.f32.mrb[0].mxu0
        %v1092 = vadd.f32 0.0, %v1091
        %v1093 = vpop.f32.mrb[0].mxu0
        %1094 = vdwg.mxu0
        %1095 = vmatprep.subr.mxu0 0.0
        %v1096 = vand.u32 %v419, 4294901760
        %v1097 = vsub.f32 %v419, %v1096
        %v1098 = vand.u32 %v1097, 4294901760
        %v1099 = vsub.f32 %v1097, %v1098
        %v1100 = vand.u32 %v1099, 4294901760
        %1101 = vmatpush1.msra.mxu0 %v1100
        %1102 = vmatprep.subr.mxu0 0.0
        %v1103 = vand.u32 %v422, 4294901760
        %v1104 = vsub.f32 %v422, %v1103
        %v1105 = vand.u32 %v1104, 4294901760
        %v1106 = vsub.f32 %v1104, %v1105
        %v1107 = vand.u32 %v1106, 4294901760
        %1108 = vmatpush1.msra.mxu0 %v1107
        %1109 = vmatprep.subr.mxu0 0.0
        %v1110 = vand.u32 %v425, 4294901760
        %v1111 = vsub.f32 %v425, %v1110
        %v1112 = vand.u32 %v1111, 4294901760
        %v1113 = vsub.f32 %v1111, %v1112
        %v1114 = vand.u32 %v1113, 4294901760
        %1115 = vmatpush1.msra.mxu0 %v1114
        %1116 = vmatprep.subr.mxu0 0.0
        %v1117 = vand.u32 %v428, 4294901760
        %v1118 = vsub.f32 %v428, %v1117
        %v1119 = vand.u32 %v1118, 4294901760
        %v1120 = vsub.f32 %v1118, %v1119
        %v1121 = vand.u32 %v1120, 4294901760
        %1122 = vmatpush1.msra.mxu0 %v1121
        %1123 = vmatprep.subr.mxu0 0.0
        %v1124 = vand.u32 %v444, 4294901760
        %v1125 = vsub.f32 %v444, %v1124
        %v1126 = vand.u32 %v1125, 4294901760
        %v1127 = vsub.f32 %v1125, %v1126
        %v1128 = vand.u32 %v1127, 4294901760
        %1129 = vmatpush1.msra.mxu0 %v1128
        %1130 = vmatprep.subr.mxu0 0.0
        %1131 = vmatpush1.msra.mxu0 0.0
        %1132 = vmatprep.subr.mxu0 0.0
        %1133 = vmatpush1.msra.mxu0 0.0
        %1134 = vmatprep.subr.mxu0 0.0
        %1135 = vmatpush1.msra.mxu0 0.0
        %1136 = vmatprep.subr.mxu0 0.0
        %1137 = vmatpush1.msra.mxu0 0.0
        %1138 = vmatprep.subr.mxu0 0.0
        %1139 = vmatpush1.msra.mxu0 0.0
        %1140 = vmatprep.subr.mxu0 0.0
        %1141 = vmatpush1.msra.mxu0 0.0
        %1142 = vmatprep.subr.mxu0 0.0
        %1143 = vmatpush1.msra.mxu0 0.0
        %1144 = vmatprep.subr.mxu0 0.0
        %1145 = vmatpush1.msra.mxu0 0.0
        %1146 = vmatprep.subr.mxu0 0.0
        %1147 = vmatpush1.msra.mxu0 0.0
        %1148 = vmatprep.subr.mxu0 0.0
        %1149 = vmatpush1.msra.mxu0 0.0
        %1150 = vmatprep.subr.mxu0 0.0
        %1151 = vmatpush1.msra.mxu0 0.0
        %1152 = vmatprep.subr.mxu0 0.0
        %1153 = vmatpush1.msra.mxu0 0.0
        %1154 = vmatprep.subr.mxu0 0.0
        %1155 = vmatpush1.msra.mxu0 0.0
        %1156 = vmatprep.subr.mxu0 0.0
        %1157 = vmatpush1.msra.mxu0 0.0
        %1158 = vmatprep.subr.mxu0 0.0
        %1159 = vmatpush1.msra.mxu0 0.0
        %1160 = vmatprep.subr.mxu0 0.0
        %1161 = vmatpush1.msra.mxu0 0.0
        %1162 = vmatprep.subr.mxu0 0.0
        %1163 = vmatpush1.msra.mxu0 0.0
        %1164 = vmatprep.subr.mxu0 0.0
        %1165 = vmatpush1.msra.mxu0 0.0
        %1166 = vmatprep.subr.mxu0 0.0
        %1167 = vmatpush1.msra.mxu0 0.0
        %1168 = vmatprep.subr.mxu0 0.0
        %1169 = vmatpush1.msra.mxu0 0.0
        %1170 = vmatprep.subr.mxu0 0.0
        %1171 = vmatpush1.msra.mxu0 0.0
        %1172 = vmatprep.subr.mxu0 0.0
        %1173 = vmatpush1.msra.mxu0 0.0
        %1174 = vmatprep.subr.mxu0 0.0
        %1175 = vmatpush1.msra.mxu0 0.0
        %1176 = vmatprep.subr.mxu0 0.0
        %1177 = vmatpush1.msra.mxu0 0.0
        %1178 = vmatprep.subr.mxu0 0.0
        %1179 = vmatpush1.msra.mxu0 0.0
        %1180 = vmatprep.subr.mxu0 0.0
        %1181 = vmatpush1.msra.mxu0 0.0
        %1182 = vmatprep.subr.mxu0 0.0
        %1183 = vmatpush1.msra.mxu0 0.0
        %1184 = vmatprep.mubr.f32.mxu0 0.0
        %v1185 = vand.u32 %v434, 4294901760
        %1186 = vmatmul.mubr.f32.gmra.mrb[0].mxu0 %v1185
        %v1187 = vpop.f32.mrb[0].mxu0
        %v1188 = vadd.f32 %v1092, %v1187
        %v1189 = vpop.f32.mrb[0].mxu0
        %1190 = vdwg.mxu0
        %1191 = vmatprep.subr.mxu0 0.0
        %v1192 = vand.u32 %v419, 4294901760
        %v1193 = vsub.f32 %v419, %v1192
        %1194 = vmatpush1.msra.mxu0 %v1193
        %1195 = vmatprep.subr.mxu0 0.0
        %v1196 = vand.u32 %v422, 4294901760
        %v1197 = vsub.f32 %v422, %v1196
        %1198 = vmatpush1.msra.mxu0 %v1197
        %1199 = vmatprep.subr.mxu0 0.0
        %v1200 = vand.u32 %v425, 4294901760
        %v1201 = vsub.f32 %v425, %v1200
        %1202 = vmatpush1.msra.mxu0 %v1201
        %1203 = vmatprep.subr.mxu0 0.0
        %v1204 = vand.u32 %v428, 4294901760
        %v1205 = vsub.f32 %v428, %v1204
        %1206 = vmatpush1.msra.mxu0 %v1205
        %1207 = vmatprep.subr.mxu0 0.0
        %v1208 = vand.u32 %v444, 4294901760
        %v1209 = vsub.f32 %v444, %v1208
        %1210 = vmatpush1.msra.mxu0 %v1209
        %1211 = vmatprep.subr.mxu0 0.0
        %1212 = vmatpush1.msra.mxu0 0.0
        %1213 = vmatprep.subr.mxu0 0.0
        %1214 = vmatpush1.msra.mxu0 0.0
        %1215 = vmatprep.subr.mxu0 0.0
        %1216 = vmatpush1.msra.mxu0 0.0
        %1217 = vmatprep.subr.mxu0 0.0
        %1218 = vmatpush1.msra.mxu0 0.0
        %1219 = vmatprep.subr.mxu0 0.0
        %1220 = vmatpush1.msra.mxu0 0.0
        %1221 = vmatprep.subr.mxu0 0.0
        %1222 = vmatpush1.msra.mxu0 0.0
        %1223 = vmatprep.subr.mxu0 0.0
        %1224 = vmatpush1.msra.mxu0 0.0
        %1225 = vmatprep.subr.mxu0 0.0
        %1226 = vmatpush1.msra.mxu0 0.0
        %1227 = vmatprep.subr.mxu0 0.0
        %1228 = vmatpush1.msra.mxu0 0.0
        %1229 = vmatprep.subr.mxu0 0.0
        %1230 = vmatpush1.msra.mxu0 0.0
        %1231 = vmatprep.subr.mxu0 0.0
        %1232 = vmatpush1.msra.mxu0 0.0
        %1233 = vmatprep.subr.mxu0 0.0
        %1234 = vmatpush1.msra.mxu0 0.0
        %1235 = vmatprep.subr.mxu0 0.0
        %1236 = vmatpush1.msra.mxu0 0.0
        %1237 = vmatprep.subr.mxu0 0.0
        %1238 = vmatpush1.msra.mxu0 0.0
        %1239 = vmatprep.subr.mxu0 0.0
        %1240 = vmatpush1.msra.mxu0 0.0
        %1241 = vmatprep.subr.mxu0 0.0
        %1242 = vmatpush1.msra.mxu0 0.0
        %1243 = vmatprep.subr.mxu0 0.0
        %1244 = vmatpush1.msra.mxu0 0.0
        %1245 = vmatprep.subr.mxu0 0.0
        %1246 = vmatpush1.msra.mxu0 0.0
        %1247 = vmatprep.subr.mxu0 0.0
        %1248 = vmatpush1.msra.mxu0 0.0
        %1249 = vmatprep.subr.mxu0 0.0
        %1250 = vmatpush1.msra.mxu0 0.0
        %1251 = vmatprep.subr.mxu0 0.0
        %1252 = vmatpush1.msra.mxu0 0.0
        %1253 = vmatprep.subr.mxu0 0.0
        %1254 = vmatpush1.msra.mxu0 0.0
        %1255 = vmatprep.subr.mxu0 0.0
        %1256 = vmatpush1.msra.mxu0 0.0
        %1257 = vmatprep.subr.mxu0 0.0
        %1258 = vmatpush1.msra.mxu0 0.0
        %1259 = vmatprep.subr.mxu0 0.0
        %1260 = vmatpush1.msra.mxu0 0.0
        %1261 = vmatprep.subr.mxu0 0.0
        %1262 = vmatpush1.msra.mxu0 0.0
        %1263 = vmatprep.subr.mxu0 0.0
        %1264 = vmatpush1.msra.mxu0 0.0
        %1265 = vmatprep.mubr.f32.mxu0 0.0
        %v1266 = vand.u32 %v434, 4294901760
        %v1267 = vsub.f32 %v434, %v1266
        %1268 = vmatmul.mubr.f32.gmra.mrb[0].mxu0 %v1267
        %v1269 = vpop.f32.mrb[0].mxu0
        %v1270 = vadd.f32 %v1188, %v1269
        %v1271 = vpop.f32.mrb[0].mxu0
        %1272 = vdwg.mxu0
        %1273 = vmatprep.subr.mxu0 0.0
        %v1274 = vand.u32 %v419, 4294901760
        %1275 = vmatpush1.msra.mxu0 %v1274
        %1276 = vmatprep.subr.mxu0 0.0
        %v1277 = vand.u32 %v422, 4294901760
        %1278 = vmatpush1.msra.mxu0 %v1277
        %1279 = vmatprep.subr.mxu0 0.0
        %v1280 = vand.u32 %v425, 4294901760
        %1281 = vmatpush1.msra.mxu0 %v1280
        %1282 = vmatprep.subr.mxu0 0.0
        %v1283 = vand.u32 %v428, 4294901760
        %1284 = vmatpush1.msra.mxu0 %v1283
        %1285 = vmatprep.subr.mxu0 0.0
        %v1286 = vand.u32 %v444, 4294901760
        %1287 = vmatpush1.msra.mxu0 %v1286
        %1288 = vmatprep.subr.mxu0 0.0
        %1289 = vmatpush1.msra.mxu0 0.0
        %1290 = vmatprep.subr.mxu0 0.0
        %1291 = vmatpush1.msra.mxu0 0.0
        %1292 = vmatprep.subr.mxu0 0.0
        %1293 = vmatpush1.msra.mxu0 0.0
        %1294 = vmatprep.subr.mxu0 0.0
        %1295 = vmatpush1.msra.mxu0 0.0
        %1296 = vmatprep.subr.mxu0 0.0
        %1297 = vmatpush1.msra.mxu0 0.0
        %1298 = vmatprep.subr.mxu0 0.0
        %1299 = vmatpush1.msra.mxu0 0.0
        %1300 = vmatprep.subr.mxu0 0.0
        %1301 = vmatpush1.msra.mxu0 0.0
        %1302 = vmatprep.subr.mxu0 0.0
        %1303 = vmatpush1.msra.mxu0 0.0
        %1304 = vmatprep.subr.mxu0 0.0
        %1305 = vmatpush1.msra.mxu0 0.0
        %1306 = vmatprep.subr.mxu0 0.0
        %1307 = vmatpush1.msra.mxu0 0.0
        %1308 = vmatprep.subr.mxu0 0.0
        %1309 = vmatpush1.msra.mxu0 0.0
        %1310 = vmatprep.subr.mxu0 0.0
        %1311 = vmatpush1.msra.mxu0 0.0
        %1312 = vmatprep.subr.mxu0 0.0
        %1313 = vmatpush1.msra.mxu0 0.0
        %1314 = vmatprep.subr.mxu0 0.0
        %1315 = vmatpush1.msra.mxu0 0.0
        %1316 = vmatprep.subr.mxu0 0.0
        %1317 = vmatpush1.msra.mxu0 0.0
        %1318 = vmatprep.subr.mxu0 0.0
        %1319 = vmatpush1.msra.mxu0 0.0
        %1320 = vmatprep.subr.mxu0 0.0
        %1321 = vmatpush1.msra.mxu0 0.0
        %1322 = vmatprep.subr.mxu0 0.0
        %1323 = vmatpush1.msra.mxu0 0.0
        %1324 = vmatprep.subr.mxu0 0.0
        %1325 = vmatpush1.msra.mxu0 0.0
        %1326 = vmatprep.subr.mxu0 0.0
        %1327 = vmatpush1.msra.mxu0 0.0
        %1328 = vmatprep.subr.mxu0 0.0
        %1329 = vmatpush1.msra.mxu0 0.0
        %1330 = vmatprep.subr.mxu0 0.0
        %1331 = vmatpush1.msra.mxu0 0.0
        %1332 = vmatprep.subr.mxu0 0.0
        %1333 = vmatpush1.msra.mxu0 0.0
        %1334 = vmatprep.subr.mxu0 0.0
        %1335 = vmatpush1.msra.mxu0 0.0
        %1336 = vmatprep.subr.mxu0 0.0
        %1337 = vmatpush1.msra.mxu0 0.0
        %1338 = vmatprep.subr.mxu0 0.0
        %1339 = vmatpush1.msra.mxu0 0.0
        %1340 = vmatprep.subr.mxu0 0.0
        %1341 = vmatpush1.msra.mxu0 0.0
        %1342 = vmatprep.mubr.f32.mxu0 0.0
        %v1343 = vand.u32 %v434, 4294901760
        %v1344 = vsub.f32 %v434, %v1343
        %v1345 = vand.u32 %v1344, 4294901760
        %1346 = vmatmul.mubr.f32.gmra.mrb[0].mxu0 %v1345
        %v1347 = vpop.f32.mrb[0].mxu0
        %v1348 = vadd.f32 %v1270, %v1347
        %v1349 = vpop.f32.mrb[0].mxu0
        %1350 = vdwg.mxu0
        %1351 = vmatprep.subr.mxu0 0.0
        %v1352 = vand.u32 %v419, 4294901760
        %v1353 = vsub.f32 %v419, %v1352
        %v1354 = vand.u32 %v1353, 4294901760
        %1355 = vmatpush1.msra.mxu0 %v1354
        %1356 = vmatprep.subr.mxu0 0.0
        %v1357 = vand.u32 %v422, 4294901760
        %v1358 = vsub.f32 %v422, %v1357
        %v1359 = vand.u32 %v1358, 4294901760
        %1360 = vmatpush1.msra.mxu0 %v1359
        %1361 = vmatprep.subr.mxu0 0.0
        %v1362 = vand.u32 %v425, 4294901760
        %v1363 = vsub.f32 %v425, %v1362
        %v1364 = vand.u32 %v1363, 4294901760
        %1365 = vmatpush1.msra.mxu0 %v1364
        %1366 = vmatprep.subr.mxu0 0.0
        %v1367 = vand.u32 %v428, 4294901760
        %v1368 = vsub.f32 %v428, %v1367
        %v1369 = vand.u32 %v1368, 4294901760
        %1370 = vmatpush1.msra.mxu0 %v1369
        %1371 = vmatprep.subr.mxu0 0.0
        %v1372 = vand.u32 %v444, 4294901760
        %v1373 = vsub.f32 %v444, %v1372
        %v1374 = vand.u32 %v1373, 4294901760
        %1375 = vmatpush1.msra.mxu0 %v1374
        %1376 = vmatprep.subr.mxu0 0.0
        %1377 = vmatpush1.msra.mxu0 0.0
        %1378 = vmatprep.subr.mxu0 0.0
        %1379 = vmatpush1.msra.mxu0 0.0
        %1380 = vmatprep.subr.mxu0 0.0
        %1381 = vmatpush1.msra.mxu0 0.0
        %1382 = vmatprep.subr.mxu0 0.0
        %1383 = vmatpush1.msra.mxu0 0.0
        %1384 = vmatprep.subr.mxu0 0.0
        %1385 = vmatpush1.msra.mxu0 0.0
        %1386 = vmatprep.subr.mxu0 0.0
        %1387 = vmatpush1.msra.mxu0 0.0
        %1388 = vmatprep.subr.mxu0 0.0
        %1389 = vmatpush1.msra.mxu0 0.0
        %1390 = vmatprep.subr.mxu0 0.0
        %1391 = vmatpush1.msra.mxu0 0.0
        %1392 = vmatprep.subr.mxu0 0.0
        %1393 = vmatpush1.msra.mxu0 0.0
        %1394 = vmatprep.subr.mxu0 0.0
        %1395 = vmatpush1.msra.mxu0 0.0
        %1396 = vmatprep.subr.mxu0 0.0
        %1397 = vmatpush1.msra.mxu0 0.0
        %1398 = vmatprep.subr.mxu0 0.0
        %1399 = vmatpush1.msra.mxu0 0.0
        %1400 = vmatprep.subr.mxu0 0.0
        %1401 = vmatpush1.msra.mxu0 0.0
        %1402 = vmatprep.subr.mxu0 0.0
        %1403 = vmatpush1.msra.mxu0 0.0
        %1404 = vmatprep.subr.mxu0 0.0
        %1405 = vmatpush1.msra.mxu0 0.0
        %1406 = vmatprep.subr.mxu0 0.0
        %1407 = vmatpush1.msra.mxu0 0.0
        %1408 = vmatprep.subr.mxu0 0.0
        %1409 = vmatpush1.msra.mxu0 0.0
        %1410 = vmatprep.subr.mxu0 0.0
        %1411 = vmatpush1.msra.mxu0 0.0
        %1412 = vmatprep.subr.mxu0 0.0
        %1413 = vmatpush1.msra.mxu0 0.0
        %1414 = vmatprep.subr.mxu0 0.0
        %1415 = vmatpush1.msra.mxu0 0.0
        %1416 = vmatprep.subr.mxu0 0.0
        %1417 = vmatpush1.msra.mxu0 0.0
        %1418 = vmatprep.subr.mxu0 0.0
        %1419 = vmatpush1.msra.mxu0 0.0
        %1420 = vmatprep.subr.mxu0 0.0
        %1421 = vmatpush1.msra.mxu0 0.0
        %1422 = vmatprep.subr.mxu0 0.0
        %1423 = vmatpush1.msra.mxu0 0.0
        %1424 = vmatprep.subr.mxu0 0.0
        %1425 = vmatpush1.msra.mxu0 0.0
        %1426 = vmatprep.subr.mxu0 0.0
        %1427 = vmatpush1.msra.mxu0 0.0
        %1428 = vmatprep.subr.mxu0 0.0
        %1429 = vmatpush1.msra.mxu0 0.0
        %1430 = vmatprep.mubr.f32.mxu0 0.0
        %v1431 = vand.u32 %v434, 4294901760
        %1432 = vmatmul.mubr.f32.gmra.mrb[0].mxu0 %v1431
        %v1433 = vpop.f32.mrb[0].mxu0
        %v1434 = vadd.f32 %v1348, %v1433
        %v1435 = vpop.f32.mrb[0].mxu0
        %1436 = vdwg.mxu0
        %1437 = vmatprep.subr.mxu0 0.0
        %v1438 = vand.u32 %v419, 4294901760
        %1439 = vmatpush1.msra.mxu0 %v1438
        %1440 = vmatprep.subr.mxu0 0.0
        %v1441 = vand.u32 %v422, 4294901760
        %1442 = vmatpush1.msra.mxu0 %v1441
        %1443 = vmatprep.subr.mxu0 0.0
        %v1444 = vand.u32 %v425, 4294901760
        %1445 = vmatpush1.msra.mxu0 %v1444
        %1446 = vmatprep.subr.mxu0 0.0
        %v1447 = vand.u32 %v428, 4294901760
        %1448 = vmatpush1.msra.mxu0 %v1447
        %1449 = vmatprep.subr.mxu0 0.0
        %v1450 = vand.u32 %v444, 4294901760
        %1451 = vmatpush1.msra.mxu0 %v1450
        %1452 = vmatprep.subr.mxu0 0.0
        %1453 = vmatpush1.msra.mxu0 0.0
        %1454 = vmatprep.subr.mxu0 0.0
        %1455 = vmatpush1.msra.mxu0 0.0
        %1456 = vmatprep.subr.mxu0 0.0
        %1457 = vmatpush1.msra.mxu0 0.0
        %1458 = vmatprep.subr.mxu0 0.0
        %1459 = vmatpush1.msra.mxu0 0.0
        %1460 = vmatprep.subr.mxu0 0.0
        %1461 = vmatpush1.msra.mxu0 0.0
        %1462 = vmatprep.subr.mxu0 0.0
        %1463 = vmatpush1.msra.mxu0 0.0
        %1464 = vmatprep.subr.mxu0 0.0
        %1465 = vmatpush1.msra.mxu0 0.0
        %1466 = vmatprep.subr.mxu0 0.0
        %1467 = vmatpush1.msra.mxu0 0.0
        %1468 = vmatprep.subr.mxu0 0.0
        %1469 = vmatpush1.msra.mxu0 0.0
        %1470 = vmatprep.subr.mxu0 0.0
        %1471 = vmatpush1.msra.mxu0 0.0
        %1472 = vmatprep.subr.mxu0 0.0
        %1473 = vmatpush1.msra.mxu0 0.0
        %1474 = vmatprep.subr.mxu0 0.0
        %1475 = vmatpush1.msra.mxu0 0.0
        %1476 = vmatprep.subr.mxu0 0.0
        %1477 = vmatpush1.msra.mxu0 0.0
        %1478 = vmatprep.subr.mxu0 0.0
        %1479 = vmatpush1.msra.mxu0 0.0
        %1480 = vmatprep.subr.mxu0 0.0
        %1481 = vmatpush1.msra.mxu0 0.0
        %1482 = vmatprep.subr.mxu0 0.0
        %1483 = vmatpush1.msra.mxu0 0.0
        %1484 = vmatprep.subr.mxu0 0.0
        %1485 = vmatpush1.msra.mxu0 0.0
        %1486 = vmatprep.subr.mxu0 0.0
        %1487 = vmatpush1.msra.mxu0 0.0
        %1488 = vmatprep.subr.mxu0 0.0
        %1489 = vmatpush1.msra.mxu0 0.0
        %1490 = vmatprep.subr.mxu0 0.0
        %1491 = vmatpush1.msra.mxu0 0.0
        %1492 = vmatprep.subr.mxu0 0.0
        %1493 = vmatpush1.msra.mxu0 0.0
        %1494 = vmatprep.subr.mxu0 0.0
        %1495 = vmatpush1.msra.mxu0 0.0
        %1496 = vmatprep.subr.mxu0 0.0
        %1497 = vmatpush1.msra.mxu0 0.0
        %1498 = vmatprep.subr.mxu0 0.0
        %1499 = vmatpush1.msra.mxu0 0.0
        %1500 = vmatprep.subr.mxu0 0.0
        %1501 = vmatpush1.msra.mxu0 0.0
        %1502 = vmatprep.subr.mxu0 0.0
        %1503 = vmatpush1.msra.mxu0 0.0
        %1504 = vmatprep.subr.mxu0 0.0
        %1505 = vmatpush1.msra.mxu0 0.0
        %1506 = vmatprep.mubr.f32.mxu0 0.0
        %v1507 = vand.u32 %v434, 4294901760
        %1508 = vmatmul.mubr.f32.gmra.mrb[0].mxu0 %v1507
        %v1509 = vpop.f32.mrb[0].mxu0
        %v1510 = vadd.f32 %v1434, %v1509
        %v1511 = vpop.f32.mrb[0].mxu0
        %1512 = vdwg.mxu0
        %1514 = vset.pattern.permute.xlu0 0
        %1515 = vperm.xlu0 %1514, %v215
        %v1516 = vpop.permute.xlu0 %1515
        %v1518 = vmul.f32 %v1011, %v1516
        %v1519 = vmul.f32 %v1013, %v1516
        %v1520 = vmul.f32 %v1510, %v1516
        %1522 = vset.pattern.permute.xlu0 0
        %1523 = vperm.xlu0 %1522, %v216
        %v1524 = vpop.permute.xlu0 %1523
        %v1526 = vadd.f32 %v1518, %v1524
        %v1527 = vadd.f32 %v1519, %v1524
        %v1528 = vadd.f32 %v1520, %v1524
        %v1529 = vmax.f32 %v1526, 0.0
        %v1530 = vmax.f32 %v1527, 0.0
        %v1531 = vmax.f32 %v1528, 0.0
        %1532 = vst [vmem:[%s213] sm:$0xff] %v1529
        %1533 = vst [vmem:[%s213 + $0x8] sm:$0xff] %v1530
        %1534 = vst [vmem:[%s213 + $0x10] sm:$0xff] %v1531
        %s1535 = sand.u32 %s118, 1
        %s1536 = scalar_lea.sflag [#allocation5], %s1535
        %s1537 = sand.u32 %s118, 1
        %s1538 = smul.addr %s1537, 24
        %s1539 = scalar_lea.vmem [#allocation6], %s1538
        // Predicated region
        $region41: #{tpu_custom_call.1} parent=35 // pred_check
          %p1540 = pneg %p128
        $region42: #{tpu_custom_call.1} parent=35 // pred_check_branch
          %1542 = sbr.rel (%p1540) target = $region44
        $region43: #{tpu_custom_call.1} parent=35 // pred_region
          %s1544 = ssub.s32 384, 384
          %1545 = vsyncadd %s1536, %s1544
          %s1546 = smul.addr %s21, 3
          %s1547 = smul.addr %s1546, 128
          %s1548 = scalar_lea.hbm %s4, %s1547
          %s1550 = sshll.u32 %s1539, 4
          %s1551 = int_to_ptr.vmem [resolvable:$true] %s1550
          %1553 = dma.vmem_to_hbm [thread:$0]  %s1551, 384, %s1548, %s1536
        $region44: #{tpu_custom_call.1} parent=35 // pred_fallthru
          _
      $region36: #{tpu_custom_call.1} parent=5 // pred_fallthru
        _
      %p1554 = scmp.le.s32.totalorder 2, %s16
      // Predicated region
      $region45: #{tpu_custom_call.1} parent=5 // pred_check
        %p1555 = pneg %p1554
      $region46: #{tpu_custom_call.1} parent=5 // pred_check_branch
        %1557 = sbr.rel (%p1555) target = $region48
      $region47: #{tpu_custom_call.1} parent=5 // pred_region
        %s1558 = ssub.s32 %s16, 2
        // Predicated region
        $region49: #{tpu_custom_call.1} parent=47 // pred_check
          %p1559 = pneg %p134
        $region50: #{tpu_custom_call.1} parent=47 // pred_check_branch
          %1561 = sbr.rel (%p1559) target = $region52
        $region51: #{tpu_custom_call.1} parent=47 // pred_region
          %s1562 = sand.u32 %s119, 1
          %s1563 = scalar_lea.sflag [#allocation5], %s1562
          %s1564 = sand.u32 %s119, 1
          %s1565 = smul.addr %s1564, 24
          %s1566 = scalar_lea.vmem [#allocation6], %s1565
          %1567 = dma.done %s1563, 384
        $region52: #{tpu_custom_call.1} parent=47 // pred_fallthru
          _
      $region48: #{tpu_custom_call.1} parent=5 // pred_fallthru
        _
    $region6: #{tpu_custom_call.1} parent=1 // loop_footer
      %s20 = sadd.s32 1, %s16
    $region7: #{tpu_custom_call.1} parent=1 // loop_footer_branch
      %15 = sbr.rel target = $region3
    $region8: #{tpu_custom_call.1} parent=1 // loop_exit
      _
    %1568 = vsyncpa [#allocation4], 1
    %s1569 = scalar_lea.sflag [#allocation4], 1
    %1570 = vsyncpa %s1569, 1
    %1571 = vsyncpa [#allocation5], 1
    %s1572 = scalar_lea.sflag [#allocation5], 1
    %1573 = vsyncpa %s1572, 1

</llo_original>
